<compile_context>
chip_gen: v7x
topology: tpu7x:2x2x1
jax: 0.10.0
libtpu: 0.0.40
codegen_flags: <defaults>
</compile_context>

<pallas_src>
import functools

import jax
import jax.numpy as jnp
from jax.experimental import pallas as pl
from jax.experimental.pallas import tpu as pltpu


def _round_up(x, m):
    return (x + m - 1) // m * m


def _num_batch_tiles():
    """2 tiles on v7x (one per TensorCore), 1 tile on v5e/v6e (minimize steps)."""
    try:
        kind = jax.devices()[0].device_kind.lower()
    except Exception:
        kind = ""
    return 2 if ("v7" in kind or "7x" in kind) else 1


def mlp_classifier_kernel(u_ref, v_ref, w1_ref, b1_ref, w2_ref, b2_ref, y_ref):
    """One batch tile: shared representation + Linear/Tanh/Linear, fully fused."""
    bf16 = jnp.bfloat16

    u_bf = u_ref[...]                               # [TM, D] bf16
    v_bf = v_ref[...]                               # [TM, D] bf16

    # shared_sentence_encoder features in f32 on the VPU (v5e has no bf16 VALU).
    u = u_bf.astype(jnp.float32)
    v = v_bf.astype(jnp.float32)
    abs_diff = jnp.abs(u - v)
    prod = u * v

    # Single [TM, 4D] bf16 concat in VMEM (never hits HBM), one K=4D matmul:
    # MXU accumulates over K internally -> no repeated [TM, H] f32 writebacks.
    xcat = jnp.concatenate(
        [u_bf, v_bf, abs_diff.astype(bf16), prod.astype(bf16)], axis=-1)

    h = jnp.dot(xcat, w1_ref[...], preferred_element_type=jnp.float32)
    h = jnp.tanh(h + b1_ref[...])                   # [TM, H] f32

    y = jnp.dot(h.astype(bf16), w2_ref[...], preferred_element_type=jnp.float32)
    y_ref[...] = (y + b2_ref[...]).astype(y_ref.dtype)   # [TM, O_pad] lane-dense


def prepare_classifier_params(w1, b1, w2, b2, *, o_pad=128):
    """One-time weight prep (do NOT run per forward call).

    Returns (w1_bf16 [4D,H], b1_f32 [1,H], w2_bf16 [H,O_pad], b2_f32 [1,O_pad]).
    """
    D4, H = w1.shape
    O = w2.shape[1]
    opad = _round_up(max(O, o_pad), 128)
    w1_bf = w1.astype(jnp.bfloat16)
    b1_f = jnp.reshape(b1, (1, H)).astype(jnp.float32)
    w2_p = jnp.pad(w2, ((0, 0), (0, opad - O))).astype(jnp.bfloat16)
    b2_p = jnp.pad(jnp.reshape(b2, (1, O)), ((0, 0), (0, opad - O))).astype(jnp.float32)
    return w1_bf, b1_f, w2_p, b2_p


@functools.partial(jax.jit, static_argnames=("num_classes", "num_batch_tiles"))
def mlp_classifier_forward(u, v, w1_bf, b1_f, w2_p, b2_p, *,
                           num_classes=3, num_batch_tiles=1):
    """u, v: [B, D] (f32 or bf16). Weights from prepare_classifier_params()."""
    B, D = u.shape
    D4, H = w1_bf.shape
    opad = w2_p.shape[1]
    assert D4 == 4 * D, "W1 must have shape [4*D, H]"
    assert D % 128 == 0 and H % 128 == 0 and opad % 128 == 0

    # Stream encoder outputs as bf16 (no-op if already bf16).
    u = u.astype(jnp.bfloat16)
    v = v.astype(jnp.bfloat16)

    # ---- Batch tiling: as few grid steps as possible. ----
    n_tiles = max(1, num_batch_tiles)
    tm = _round_up(pl.cdiv(B, n_tiles), 8)
    if tm >= 128:
        tm = _round_up(tm, 128)          # avoid odd non-128-multiple tiles
    b_pad = tm * n_tiles
    if b_pad != B:
        u = jnp.pad(u, ((0, b_pad - B), (0, 0)))
        v = jnp.pad(v, ((0, b_pad - B), (0, 0)))

    batch = lambda i: (i, 0)
    const = lambda i: (0, 0)             # weights resident across batch tiles

    cost = pl.CostEstimate(
        flops=2 * b_pad * (4 * D * H + H * opad),
        transcendentals=b_pad * H,
        bytes_accessed=(4 * D * H + H * opad) * 2 + (H + opad) * 4
                       + 2 * b_pad * D * 2 + b_pad * opad * 4,
    )

    y_pad = pl.pallas_call(
        mlp_classifier_kernel,
        out_shape=jax.ShapeDtypeStruct((b_pad, opad), jnp.float32),
        grid_spec=pltpu.PrefetchScalarGridSpec(
            num_scalar_prefetch=0,
            grid=(n_tiles,),
            in_specs=[
                pl.BlockSpec((tm, D), batch),       # u tile (bf16)
                pl.BlockSpec((tm, D), batch),       # v tile (bf16)
                pl.BlockSpec((4 * D, H), const),    # W1 (resident, bf16)
                pl.BlockSpec((1, H), const),        # b1 (f32)
                pl.BlockSpec((H, opad), const),     # W2 (padded, bf16)
                pl.BlockSpec((1, opad), const),     # b2 (padded, f32)
            ],
            out_specs=pl.BlockSpec((tm, opad), batch),
        ),
        compiler_params=pltpu.CompilerParams(
            dimension_semantics=("parallel",),
        ),
        cost_estimate=cost,
    )(u, v, w1_bf, b1_f, w2_p, b2_p)

    return y_pad[:B, :num_classes]


if __name__ == "__main__":
    # Shapes implied by the module: encoder dim D, input_size = 4*D,
    # hidden_size = 512, output_size = 3.
    B = 64         # small batch, already a multiple of the tile (no pad path)
    D = 128        # encoder dimensionality -> input_size = 512
    H = 512        # hidden_size
    O = 3          # output_size (3-way NLI classes)

    key = jax.random.PRNGKey(0)
    ku, kv, kw1, kb1, kw2, kb2 = jax.random.split(key, 6)

    u_f32 = jax.random.normal(ku, (B, D), dtype=jnp.float32)
    v_f32 = jax.random.normal(kv, (B, D), dtype=jnp.float32)

    # nn.Linear-style uniform(-1/sqrt(fan_in), 1/sqrt(fan_in)) init.
    lim1 = 1.0 / jnp.sqrt(4.0 * D)
    w1 = jax.random.uniform(kw1, (4 * D, H), jnp.float32, -lim1, lim1)
    b1 = jax.random.uniform(kb1, (1, H), jnp.float32, -lim1, lim1)
    lim2 = 1.0 / jnp.sqrt(1.0 * H)
    w2 = jax.random.uniform(kw2, (H, O), jnp.float32, -lim2, lim2)
    b2 = jax.random.uniform(kb2, (1, O), jnp.float32, -lim2, lim2)

    # One-time prep: bf16 weights, padded lane-dense output columns.
    params = prepare_classifier_params(w1, b1, w2, b2)

    # Encoder outputs stored/streamed as bf16 (cast once, not per call).
    u_bf = u_f32.astype(jnp.bfloat16)
    v_bf = v_f32.astype(jnp.bfloat16)

    n_tiles = _num_batch_tiles()
    y = mlp_classifier_forward(u_bf, v_bf, *params,
                               num_classes=O, num_batch_tiles=n_tiles)
    y = jax.block_until_ready(y)

    # Pure-JAX f32 reference on the same bf16-rounded inputs (kernel uses bf16
    # matmul operands with f32 accumulation -> loosened tolerance).
    u_r = u_bf.astype(jnp.float32)
    v_r = v_bf.astype(jnp.float32)
    x_ref = jnp.concatenate([u_r, v_r, jnp.abs(u_r - v_r), u_r * v_r], axis=1)
    y_ref = jnp.tanh(x_ref @ w1 + b1) @ w2 + b2

    assert y.shape == (B, O)
    assert jnp.allclose(y, y_ref, atol=2e-2, rtol=2e-2), (
        float(jnp.max(jnp.abs(y - y_ref))))

    print("KERNEL_OK")
</pallas_src>

<mosaic_0001>
module attributes {stable_mosaic.version = 11 : i64} {
  func.func @mlp_classifier_kernel(%arg0: i32, %arg1: memref<64x128xbf16, #tpu.memory_space<vmem>>, %arg2: memref<64x128xbf16, #tpu.memory_space<vmem>>, %arg3: memref<512x512xbf16, #tpu.memory_space<vmem>>, %arg4: memref<1x512xf32, #tpu.memory_space<vmem>>, %arg5: memref<512x128xbf16, #tpu.memory_space<vmem>>, %arg6: memref<1x128xf32, #tpu.memory_space<vmem>>, %arg7: memref<64x128xf32, #tpu.memory_space<vmem>>) attributes {dimension_semantics = [#tpu.dimension_semantics<parallel>], iteration_bounds = array<i64: 1>, scalar_prefetch = 0 : i64, scratch_operands = 0 : i64, tpu.core_type = #tpu.core_type<tc>, window_params = [{transform_indices = @transform_0, window_bounds = array<i64: 64, 128>}, {transform_indices = @transform_1, window_bounds = array<i64: 64, 128>}, {pipeline_mode = #tpu.pipeline_mode<synchronous>, transform_indices = @transform_2, window_bounds = array<i64: 512, 512>}, {pipeline_mode = #tpu.pipeline_mode<synchronous>, transform_indices = @transform_3, window_bounds = array<i64: 1, 512>}, {pipeline_mode = #tpu.pipeline_mode<synchronous>, transform_indices = @transform_4, window_bounds = array<i64: 512, 128>}, {pipeline_mode = #tpu.pipeline_mode<synchronous>, transform_indices = @transform_5, window_bounds = array<i64: 1, 128>}, {transform_indices = @transform_6, window_bounds = array<i64: 64, 128>}]} {
    %c0 = arith.constant 0 : index
    %c0_0 = arith.constant 0 : index
    %0 = vector.load %arg1[%c0, %c0_0] : memref<64x128xbf16, #tpu.memory_space<vmem>>, vector<64x128xbf16>
    %c0_1 = arith.constant 0 : index
    %c0_2 = arith.constant 0 : index
    %1 = vector.load %arg2[%c0_1, %c0_2] : memref<64x128xbf16, #tpu.memory_space<vmem>>, vector<64x128xbf16>
    %2 = arith.extf %0 : vector<64x128xbf16> to vector<64x128xf32>
    %3 = arith.extf %1 : vector<64x128xbf16> to vector<64x128xf32>
    %4 = arith.subf %2, %3 : vector<64x128xf32>
    %5 = math.absf %4 : vector<64x128xf32>
    %6 = arith.mulf %2, %3 : vector<64x128xf32>
    %7 = arith.truncf %5 : vector<64x128xf32> to vector<64x128xbf16>
    %8 = arith.truncf %6 : vector<64x128xf32> to vector<64x128xbf16>
    %9 = tpu.concatenate %0, %1, %7, %8 in 1 : vector<64x128xbf16>, vector<64x128xbf16>, vector<64x128xbf16>, vector<64x128xbf16> -> vector<64x512xbf16>
    %c0_3 = arith.constant 0 : index
    %c0_4 = arith.constant 0 : index
    %10 = vector.load %arg3[%c0_3, %c0_4] : memref<512x512xbf16, #tpu.memory_space<vmem>>, vector<512x512xbf16>
    %cst = arith.constant dense<0.000000e+00> : vector<64x512xf32>
    %11 = tpu.matmul %9, %10, %cst {dimension_numbers = #tpu.dot_dimension_numbers<[1], [0], [0], [1], [0, 0, 1, 1], [], []>} : vector<64x512xbf16>, vector<512x512xbf16>, vector<64x512xf32> -> vector<64x512xf32>
    %c0_5 = arith.constant 0 : index
    %c0_6 = arith.constant 0 : index
    %12 = vector.load %arg4[%c0_5, %c0_6] : memref<1x512xf32, #tpu.memory_space<vmem>>, vector<1x512xf32>
    %13 = vector.broadcast %12 : vector<1x512xf32> to vector<64x512xf32>
    %14 = arith.addf %11, %13 : vector<64x512xf32>
    %15 = math.tanh %14 : vector<64x512xf32>
    %16 = arith.truncf %15 : vector<64x512xf32> to vector<64x512xbf16>
    %c0_7 = arith.constant 0 : index
    %c0_8 = arith.constant 0 : index
    %17 = vector.load %arg5[%c0_7, %c0_8] : memref<512x128xbf16, #tpu.memory_space<vmem>>, vector<512x128xbf16>
    %cst_9 = arith.constant dense<0.000000e+00> : vector<64x128xf32>
    %18 = tpu.matmul %16, %17, %cst_9 {dimension_numbers = #tpu.dot_dimension_numbers<[1], [0], [0], [1], [0, 0, 1, 1], [], []>} : vector<64x512xbf16>, vector<512x128xbf16>, vector<64x128xf32> -> vector<64x128xf32>
    %c0_10 = arith.constant 0 : index
    %c0_11 = arith.constant 0 : index
    %19 = vector.load %arg6[%c0_10, %c0_11] : memref<1x128xf32, #tpu.memory_space<vmem>>, vector<1x128xf32>
    %20 = vector.broadcast %19 : vector<1x128xf32> to vector<64x128xf32>
    %21 = arith.addf %18, %20 : vector<64x128xf32>
    %c0_12 = arith.constant 0 : index
    %c0_13 = arith.constant 0 : index
    %22 = vector.load %arg7[%c0_12, %c0_13] : memref<64x128xf32, #tpu.memory_space<vmem>>, vector<64x128xf32>
    tpu.vector_store %arg7[%c0_12, %c0_13], %21 {strides = array<i32>} : memref<64x128xf32, #tpu.memory_space<vmem>>, vector<64x128xf32>,
    return
  }
  func.func @transform_0(%arg0: i32) -> (i32, i32) {
    %c0_i32 = arith.constant 0 : i32
    %c0_i32_0 = arith.constant 0 : i32
    return %arg0, %c0_i32 : i32, i32
  }
  func.func @transform_1(%arg0: i32) -> (i32, i32) {
    %c0_i32 = arith.constant 0 : i32
    %c0_i32_0 = arith.constant 0 : i32
    return %arg0, %c0_i32 : i32, i32
  }
  func.func @transform_2(%arg0: i32) -> (i32, i32) {
    %c0_i32 = arith.constant 0 : i32
    %c0_i32_0 = arith.constant 0 : i32
    %c0_i32_1 = arith.constant 0 : i32
    return %c0_i32, %c0_i32_0 : i32, i32
  }
  func.func @transform_3(%arg0: i32) -> (i32, i32) {
    %c0_i32 = arith.constant 0 : i32
    %c0_i32_0 = arith.constant 0 : i32
    %c0_i32_1 = arith.constant 0 : i32
    return %c0_i32, %c0_i32_0 : i32, i32
  }
  func.func @transform_4(%arg0: i32) -> (i32, i32) {
    %c0_i32 = arith.constant 0 : i32
    %c0_i32_0 = arith.constant 0 : i32
    %c0_i32_1 = arith.constant 0 : i32
    return %c0_i32, %c0_i32_0 : i32, i32
  }
  func.func @transform_5(%arg0: i32) -> (i32, i32) {
    %c0_i32 = arith.constant 0 : i32
    %c0_i32_0 = arith.constant 0 : i32
    %c0_i32_1 = arith.constant 0 : i32
    return %c0_i32, %c0_i32_0 : i32, i32
  }
  func.func @transform_6(%arg0: i32) -> (i32, i32) {
    %c0_i32 = arith.constant 0 : i32
    %c0_i32_0 = arith.constant 0 : i32
    return %arg0, %c0_i32 : i32, i32
  }
}

</mosaic_0001>

<llo_original>
// kernel: mlp_classifier_forward.1
$region0: #{mlp_classifier_forward.1}
  #allocation0 [shape = 'u32[]', space=smem, size = 0x4, offset = 0x4, fixed_abs, tag = 'smem constant byte address 0x4 - core index']
  #allocation1 [shape = 'u32[144,128]{1,0:T(1,128)}', space=vmem, size = 0x12000, scoped, tag = 'internal scratch']
  %s0 = inlined_call_operand.hbm [shape: bf16[64,128], index: 0, kind: input, shape index: {}]
  %s1 = inlined_call_operand.hbm [shape: bf16[64,128], index: 1, kind: input, shape index: {}]
  %s2 = inlined_call_operand.hbm [shape: bf16[512,512], index: 2, kind: input, shape index: {}]
  %s3 = inlined_call_operand.vmem [shape: f32[1,512], index: 3, kind: input, shape index: {}]
  %s4 = inlined_call_operand.hbm [shape: bf16[512,128], index: 4, kind: input, shape index: {}]
  %s5 = inlined_call_operand.vmem [shape: f32[1,128], index: 5, kind: input, shape index: {}]
  %s6 = inlined_call_operand.vmem [shape: f32[64,128], index: 6, kind: output, shape index: {}]
  %s7 = sld [smem:[#allocation0]]
  $region50: #{mlp_classifier_forward.1} parent=0
    _
  %s9 = ssub.s32 1, %s7
  %s10 = scalar_select 0, %s9, %s7
  $region1: #{mlp_classifier_forward.1} parent=0
    #allocation2 [shape = 'u8[16384]{0}', space=vmem, size = 0x4000, scoped, tag = 'input window, operand 0, single buffered']
    #allocation3 [shape = 's32[1]{0}', space=sflag, size = 0x4, scoped, tag = 'scoped memory for mlp_classifier_forward.1']
    #allocation4 [shape = 'u8[16384]{0}', space=vmem, size = 0x4000, scoped, tag = 'input window, operand 1, single buffered']
    #allocation5 [shape = 's32[1]{0}', space=sflag, size = 0x4, scoped, tag = 'scoped memory for mlp_classifier_forward.1']
    #allocation6 [shape = 'u8[524288]{0}', space=vmem, size = 0x80000, scoped, tag = 'input window, operand 2, single buffered']
    #allocation7 [shape = 'u8[131072]{0}', space=vmem, size = 0x20000, scoped, tag = 'input window, operand 4, single buffered']
    #allocation8 [shape = 's32[1]{0}', space=sflag, size = 0x4, scoped, tag = 'scoped memory for mlp_classifier_forward.1']
    %11 = vsyncpa [#allocation3], 0
    %12 = vsyncpa [#allocation5], 0
    %13 = vsyncpa [#allocation8], 0
    // Predicated region
    $region2: #{mlp_classifier_forward.1} parent=1 // pred_check
      _
    $region3: #{mlp_classifier_forward.1} parent=1 // pred_check_branch
      %15 = sbr.rel (0) target = $region5
    $region4: #{mlp_classifier_forward.1} parent=1 // pred_region
      %s17 = ssub.s32 512, 512
      %18 = vsyncadd [#allocation3], %s17
      %s19 = sshll.u32 [#allocation2], 4
      %s20 = int_to_ptr.vmem [resolvable:$true] %s19
      %25 = dma.hbm_to_vmem [thread:$0]  %s0, 512, %s20, [#allocation3], 64, 64, 4
    $region5: #{mlp_classifier_forward.1} parent=1 // pred_fallthru
      _
    // Predicated region
    $region6: #{mlp_classifier_forward.1} parent=1 // pred_check
      _
    $region7: #{mlp_classifier_forward.1} parent=1 // pred_check_branch
      %27 = sbr.rel (0) target = $region9
    $region8: #{mlp_classifier_forward.1} parent=1 // pred_region
      %s29 = ssub.s32 512, 512
      %30 = vsyncadd [#allocation5], %s29
      %s31 = sshll.u32 [#allocation4], 4
      %s32 = int_to_ptr.vmem [resolvable:$true] %s31
      %37 = dma.hbm_to_vmem [thread:$0]  %s1, 512, %s32, [#allocation5], 64, 64, 4
    $region9: #{mlp_classifier_forward.1} parent=1 // pred_fallthru
      _
    // Predicated region
    $region10: #{mlp_classifier_forward.1} parent=1 // pred_check
      _
    $region11: #{mlp_classifier_forward.1} parent=1 // pred_check_branch
      %39 = sbr.rel (0) target = $region13
    $region12: #{mlp_classifier_forward.1} parent=1 // pred_region
      %s41 = ssub.s32 16384, 16384
      %42 = vsyncadd [#allocation5], %s41
      %s43 = sshll.u32 [#allocation6], 4
      %s44 = int_to_ptr.vmem [resolvable:$true] %s43
      %49 = dma.hbm_to_vmem [thread:$0]  %s2, 16384, %s44, [#allocation5], 256, 256, 16
    $region13: #{mlp_classifier_forward.1} parent=1 // pred_fallthru
      _
    // Predicated region
    $region14: #{mlp_classifier_forward.1} parent=1 // pred_check
      _
    $region15: #{mlp_classifier_forward.1} parent=1 // pred_check_branch
      %51 = sbr.rel (0) target = $region17
    $region16: #{mlp_classifier_forward.1} parent=1 // pred_region
      _
    $region17: #{mlp_classifier_forward.1} parent=1 // pred_fallthru
      _
    // Predicated region
    $region18: #{mlp_classifier_forward.1} parent=1 // pred_check
      _
    $region19: #{mlp_classifier_forward.1} parent=1 // pred_check_branch
      %53 = sbr.rel (0) target = $region21
    $region20: #{mlp_classifier_forward.1} parent=1 // pred_region
      %s55 = ssub.s32 4096, 4096
      %56 = vsyncadd [#allocation8], %s55
      %s57 = sshll.u32 [#allocation7], 4
      %s58 = int_to_ptr.vmem [resolvable:$true] %s57
      %63 = dma.hbm_to_vmem [thread:$0]  %s4, 4096, %s58, [#allocation8], 64, 64, 4
    $region21: #{mlp_classifier_forward.1} parent=1 // pred_fallthru
      _
    // Predicated region
    $region22: #{mlp_classifier_forward.1} parent=1 // pred_check
      _
    $region23: #{mlp_classifier_forward.1} parent=1 // pred_check_branch
      %65 = sbr.rel (0) target = $region25
    $region24: #{mlp_classifier_forward.1} parent=1 // pred_region
      _
    $region25: #{mlp_classifier_forward.1} parent=1 // pred_fallthru
      _
    // Predicated region
    $region26: #{mlp_classifier_forward.1} parent=1 // pred_check
      _
    $region27: #{mlp_classifier_forward.1} parent=1 // pred_check_branch
      %67 = sbr.rel (0) target = $region29
    $region28: #{mlp_classifier_forward.1} parent=1 // pred_region
      %68 = dma.done [#allocation3], 512
    $region29: #{mlp_classifier_forward.1} parent=1 // pred_fallthru
      _
    // Predicated region
    $region30: #{mlp_classifier_forward.1} parent=1 // pred_check
      _
    $region31: #{mlp_classifier_forward.1} parent=1 // pred_check_branch
      %70 = sbr.rel (0) target = $region33
    $region32: #{mlp_classifier_forward.1} parent=1 // pred_region
      %71 = dma.done [#allocation5], 512
    $region33: #{mlp_classifier_forward.1} parent=1 // pred_fallthru
      _
    // Predicated region
    $region34: #{mlp_classifier_forward.1} parent=1 // pred_check
      _
    $region35: #{mlp_classifier_forward.1} parent=1 // pred_check_branch
      %73 = sbr.rel (0) target = $region37
    $region36: #{mlp_classifier_forward.1} parent=1 // pred_region
      %74 = dma.done [#allocation5], 16384
    $region37: #{mlp_classifier_forward.1} parent=1 // pred_fallthru
      _
    // Predicated region
    $region38: #{mlp_classifier_forward.1} parent=1 // pred_check
      _
    $region39: #{mlp_classifier_forward.1} parent=1 // pred_check_branch
      %76 = sbr.rel (0) target = $region41
    $region40: #{mlp_classifier_forward.1} parent=1 // pred_region
      %77 = dma.done [#allocation8], 4096
    $region41: #{mlp_classifier_forward.1} parent=1 // pred_fallthru
      _
    %v79 = vld [vmem:[#allocation2] sm:$0xf]
    %v80 = vld [vmem:[#allocation2 + $0x4] sm:$0xf]
    %v81 = vld [vmem:[#allocation2 + $0x8] sm:$0xf]
    %v82 = vld [vmem:[#allocation2 + $0xc] sm:$0xf]
    %v83 = vld [vmem:[#allocation2 + $0x10] sm:$0xf]
    %v84 = vld [vmem:[#allocation2 + $0x14] sm:$0xf]
    %v85 = vld [vmem:[#allocation2 + $0x18] sm:$0xf]
    %v86 = vld [vmem:[#allocation2 + $0x1c] sm:$0xf]
    %v87 = vld [vmem:[#allocation4] sm:$0xf]
    %v88 = vld [vmem:[#allocation4 + $0x4] sm:$0xf]
    %v89 = vld [vmem:[#allocation4 + $0x8] sm:$0xf]
    %v90 = vld [vmem:[#allocation4 + $0xc] sm:$0xf]
    %v91 = vld [vmem:[#allocation4 + $0x10] sm:$0xf]
    %v92 = vld [vmem:[#allocation4 + $0x14] sm:$0xf]
    %v93 = vld [vmem:[#allocation4 + $0x18] sm:$0xf]
    %v94 = vld [vmem:[#allocation4 + $0x1c] sm:$0xf]
    %v95 = vunpack.c.l.bf16 %v79
    %v96 = vunpack.c.l.bf16 %v80
    %v97 = vunpack.c.l.bf16 %v81
    %v98 = vunpack.c.l.bf16 %v82
    %v99 = vunpack.c.l.bf16 %v83
    %v100 = vunpack.c.l.bf16 %v84
    %v101 = vunpack.c.l.bf16 %v85
    %v102 = vunpack.c.l.bf16 %v86
    %v103 = vunpack.c.l.bf16 %v87
    %v104 = vunpack.c.l.bf16 %v88
    %v105 = vunpack.c.l.bf16 %v89
    %v106 = vunpack.c.l.bf16 %v90
    %v107 = vunpack.c.l.bf16 %v91
    %v108 = vunpack.c.l.bf16 %v92
    %v109 = vunpack.c.l.bf16 %v93
    %v110 = vunpack.c.l.bf16 %v94
    %v111 = vsub.f32 %v95, %v103
    %v112 = vsub.f32 %v96, %v104
    %v113 = vsub.f32 %v97, %v105
    %v114 = vsub.f32 %v98, %v106
    %v115 = vsub.f32 %v99, %v107
    %v116 = vsub.f32 %v100, %v108
    %v117 = vsub.f32 %v101, %v109
    %v118 = vsub.f32 %v102, %v110
    %v119 = vand.u32 2147483647, %v111
    %v120 = vand.u32 2147483647, %v112
    %v121 = vand.u32 2147483647, %v113
    %v122 = vand.u32 2147483647, %v114
    %v123 = vand.u32 2147483647, %v115
    %v124 = vand.u32 2147483647, %v116
    %v125 = vand.u32 2147483647, %v117
    %v126 = vand.u32 2147483647, %v118
    %v127 = vmul.f32 %v95, %v103
    %v128 = vmul.f32 %v96, %v104
    %v129 = vmul.f32 %v97, %v105
    %v130 = vmul.f32 %v98, %v106
    %v131 = vmul.f32 %v99, %v107
    %v132 = vmul.f32 %v100, %v108
    %v133 = vmul.f32 %v101, %v109
    %v134 = vmul.f32 %v102, %v110
    %v135 = vpack.c.bf16 %v120, %v119
    %v136 = vpack.c.bf16 %v122, %v121
    %v137 = vpack.c.bf16 %v124, %v123
    %v138 = vpack.c.bf16 %v126, %v125
    %v139 = vpack.c.bf16 %v128, %v127
    %v140 = vpack.c.bf16 %v130, %v129
    %v141 = vpack.c.bf16 %v132, %v131
    %v142 = vpack.c.bf16 %v134, %v133
    %v151 = vunpack.c.l.b16 %v79
    %v152 = vunpack.c.l.b16 %v80
    %v153 = vunpack.c.l.b16 %v81
    %v154 = vunpack.c.l.b16 %v82
    %v155 = vunpack.c.l.b16 %v83
    %v156 = vunpack.c.l.b16 %v84
    %v157 = vunpack.c.l.b16 %v85
    %v158 = vunpack.c.l.b16 %v86
    %v159 = vpack.c.b16 %v152, %v151
    %v160 = vpack.c.b16 %v154, %v153
    %v161 = vpack.c.b16 %v156, %v155
    %v162 = vpack.c.b16 %v158, %v157
    %v175 = vunpack.c.l.b16 %v87
    %v176 = vunpack.c.l.b16 %v88
    %v177 = vunpack.c.l.b16 %v89
    %v178 = vunpack.c.l.b16 %v90
    %v179 = vunpack.c.l.b16 %v91
    %v180 = vunpack.c.l.b16 %v92
    %v181 = vunpack.c.l.b16 %v93
    %v182 = vunpack.c.l.b16 %v94
    %v183 = vpack.c.b16 %v176, %v175
    %v184 = vpack.c.b16 %v178, %v177
    %v185 = vpack.c.b16 %v180, %v179
    %v186 = vpack.c.b16 %v182, %v181
    %v191 = vld [vmem:[#allocation6] sm:$0xff]
    %v192 = vld [vmem:[#allocation6 + $0x8] sm:$0xff]
    %v193 = vld [vmem:[#allocation6 + $0x10] sm:$0xff]
    %v194 = vld [vmem:[#allocation6 + $0x18] sm:$0xff]
    %v195 = vld [vmem:[#allocation6 + $0x20] sm:$0xff]
    %v196 = vld [vmem:[#allocation6 + $0x28] sm:$0xff]
    %v197 = vld [vmem:[#allocation6 + $0x30] sm:$0xff]
    %v198 = vld [vmem:[#allocation6 + $0x38] sm:$0xff]
    %v199 = vld [vmem:[#allocation6 + $0x40] sm:$0xff]
    %v200 = vld [vmem:[#allocation6 + $0x48] sm:$0xff]
    %v201 = vld [vmem:[#allocation6 + $0x50] sm:$0xff]
    %v202 = vld [vmem:[#allocation6 + $0x58] sm:$0xff]
    %v203 = vld [vmem:[#allocation6 + $0x60] sm:$0xff]
    %v204 = vld [vmem:[#allocation6 + $0x68] sm:$0xff]
    %v205 = vld [vmem:[#allocation6 + $0x70] sm:$0xff]
    %v206 = vld [vmem:[#allocation6 + $0x78] sm:$0xff]
    %v207 = vld [vmem:[#allocation6 + $0x80] sm:$0xff]
    %v208 = vld [vmem:[#allocation6 + $0x88] sm:$0xff]
    %v209 = vld [vmem:[#allocation6 + $0x90] sm:$0xff]
    %v210 = vld [vmem:[#allocation6 + $0x98] sm:$0xff]
    %v211 = vld [vmem:[#allocation6 + $0xa0] sm:$0xff]
    %v212 = vld [vmem:[#allocation6 + $0xa8] sm:$0xff]
    %v213 = vld [vmem:[#allocation6 + $0xb0] sm:$0xff]
    %v214 = vld [vmem:[#allocation6 + $0xb8] sm:$0xff]
    %v215 = vld [vmem:[#allocation6 + $0xc0] sm:$0xff]
    %v216 = vld [vmem:[#allocation6 + $0xc8] sm:$0xff]
    %v217 = vld [vmem:[#allocation6 + $0xd0] sm:$0xff]
    %v218 = vld [vmem:[#allocation6 + $0xd8] sm:$0xff]
    %v219 = vld [vmem:[#allocation6 + $0xe0] sm:$0xff]
    %v220 = vld [vmem:[#allocation6 + $0xe8] sm:$0xff]
    %v221 = vld [vmem:[#allocation6 + $0xf0] sm:$0xff]
    %v222 = vld [vmem:[#allocation6 + $0xf8] sm:$0xff]
    %v223 = vld [vmem:[#allocation6 + $0x100] sm:$0xff]
    %v224 = vld [vmem:[#allocation6 + $0x108] sm:$0xff]
    %v225 = vld [vmem:[#allocation6 + $0x110] sm:$0xff]
    %v226 = vld [vmem:[#allocation6 + $0x118] sm:$0xff]
    %v227 = vld [vmem:[#allocation6 + $0x120] sm:$0xff]
    %v228 = vld [vmem:[#allocation6 + $0x128] sm:$0xff]
    %v229 = vld [vmem:[#allocation6 + $0x130] sm:$0xff]
    %v230 = vld [vmem:[#allocation6 + $0x138] sm:$0xff]
    %v231 = vld [vmem:[#allocation6 + $0x140] sm:$0xff]
    %v232 = vld [vmem:[#allocation6 + $0x148] sm:$0xff]
    %v233 = vld [vmem:[#allocation6 + $0x150] sm:$0xff]
    %v234 = vld [vmem:[#allocation6 + $0x158] sm:$0xff]
    %v235 = vld [vmem:[#allocation6 + $0x160] sm:$0xff]
    %v236 = vld [vmem:[#allocation6 + $0x168] sm:$0xff]
    %v237 = vld [vmem:[#allocation6 + $0x170] sm:$0xff]
    %v238 = vld [vmem:[#allocation6 + $0x178] sm:$0xff]
    %v239 = vld [vmem:[#allocation6 + $0x180] sm:$0xff]
    %v240 = vld [vmem:[#allocation6 + $0x188] sm:$0xff]
    %v241 = vld [vmem:[#allocation6 + $0x190] sm:$0xff]
    %v242 = vld [vmem:[#allocation6 + $0x198] sm:$0xff]
    %v243 = vld [vmem:[#allocation6 + $0x1a0] sm:$0xff]
    %v244 = vld [vmem:[#allocation6 + $0x1a8] sm:$0xff]
    %v245 = vld [vmem:[#allocation6 + $0x1b0] sm:$0xff]
    %v246 = vld [vmem:[#allocation6 + $0x1b8] sm:$0xff]
    %v247 = vld [vmem:[#allocation6 + $0x1c0] sm:$0xff]
    %v248 = vld [vmem:[#allocation6 + $0x1c8] sm:$0xff]
    %v249 = vld [vmem:[#allocation6 + $0x1d0] sm:$0xff]
    %v250 = vld [vmem:[#allocation6 + $0x1d8] sm:$0xff]
    %v251 = vld [vmem:[#allocation6 + $0x1e0] sm:$0xff]
    %v252 = vld [vmem:[#allocation6 + $0x1e8] sm:$0xff]
    %v253 = vld [vmem:[#allocation6 + $0x1f0] sm:$0xff]
    %v254 = vld [vmem:[#allocation6 + $0x1f8] sm:$0xff]
    %v255 = vld [vmem:[#allocation6 + $0x200] sm:$0xff]
    %v256 = vld [vmem:[#allocation6 + $0x208] sm:$0xff]
    %v257 = vld [vmem:[#allocation6 + $0x210] sm:$0xff]
    %v258 = vld [vmem:[#allocation6 + $0x218] sm:$0xff]
    %v259 = vld [vmem:[#allocation6 + $0x220] sm:$0xff]
    %v260 = vld [vmem:[#allocation6 + $0x228] sm:$0xff]
    %v261 = vld [vmem:[#allocation6 + $0x230] sm:$0xff]
    %v262 = vld [vmem:[#allocation6 + $0x238] sm:$0xff]
    %v263 = vld [vmem:[#allocation6 + $0x240] sm:$0xff]
    %v264 = vld [vmem:[#allocation6 + $0x248] sm:$0xff]
    %v265 = vld [vmem:[#allocation6 + $0x250] sm:$0xff]
    %v266 = vld [vmem:[#allocation6 + $0x258] sm:$0xff]
    %v267 = vld [vmem:[#allocation6 + $0x260] sm:$0xff]
    %v268 = vld [vmem:[#allocation6 + $0x268] sm:$0xff]
    %v269 = vld [vmem:[#allocation6 + $0x270] sm:$0xff]
    %v270 = vld [vmem:[#allocation6 + $0x278] sm:$0xff]
    %v271 = vld [vmem:[#allocation6 + $0x280] sm:$0xff]
    %v272 = vld [vmem:[#allocation6 + $0x288] sm:$0xff]
    %v273 = vld [vmem:[#allocation6 + $0x290] sm:$0xff]
    %v274 = vld [vmem:[#allocation6 + $0x298] sm:$0xff]
    %v275 = vld [vmem:[#allocation6 + $0x2a0] sm:$0xff]
    %v276 = vld [vmem:[#allocation6 + $0x2a8] sm:$0xff]
    %v277 = vld [vmem:[#allocation6 + $0x2b0] sm:$0xff]
    %v278 = vld [vmem:[#allocation6 + $0x2b8] sm:$0xff]
    %v279 = vld [vmem:[#allocation6 + $0x2c0] sm:$0xff]
    %v280 = vld [vmem:[#allocation6 + $0x2c8] sm:$0xff]
    %v281 = vld [vmem:[#allocation6 + $0x2d0] sm:$0xff]
    %v282 = vld [vmem:[#allocation6 + $0x2d8] sm:$0xff]
    %v283 = vld [vmem:[#allocation6 + $0x2e0] sm:$0xff]
    %v284 = vld [vmem:[#allocation6 + $0x2e8] sm:$0xff]
    %v285 = vld [vmem:[#allocation6 + $0x2f0] sm:$0xff]
    %v286 = vld [vmem:[#allocation6 + $0x2f8] sm:$0xff]
    %v287 = vld [vmem:[#allocation6 + $0x300] sm:$0xff]
    %v288 = vld [vmem:[#allocation6 + $0x308] sm:$0xff]
    %v289 = vld [vmem:[#allocation6 + $0x310] sm:$0xff]
    %v290 = vld [vmem:[#allocation6 + $0x318] sm:$0xff]
    %v291 = vld [vmem:[#allocation6 + $0x320] sm:$0xff]
    %v292 = vld [vmem:[#allocation6 + $0x328] sm:$0xff]
    %v293 = vld [vmem:[#allocation6 + $0x330] sm:$0xff]
    %v294 = vld [vmem:[#allocation6 + $0x338] sm:$0xff]
    %v295 = vld [vmem:[#allocation6 + $0x340] sm:$0xff]
    %v296 = vld [vmem:[#allocation6 + $0x348] sm:$0xff]
    %v297 = vld [vmem:[#allocation6 + $0x350] sm:$0xff]
    %v298 = vld [vmem:[#allocation6 + $0x358] sm:$0xff]
    %v299 = vld [vmem:[#allocation6 + $0x360] sm:$0xff]
    %v300 = vld [vmem:[#allocation6 + $0x368] sm:$0xff]
    %v301 = vld [vmem:[#allocation6 + $0x370] sm:$0xff]
    %v302 = vld [vmem:[#allocation6 + $0x378] sm:$0xff]
    %v303 = vld [vmem:[#allocation6 + $0x380] sm:$0xff]
    %v304 = vld [vmem:[#allocation6 + $0x388] sm:$0xff]
    %v305 = vld [vmem:[#allocation6 + $0x390] sm:$0xff]
    %v306 = vld [vmem:[#allocation6 + $0x398] sm:$0xff]
    %v307 = vld [vmem:[#allocation6 + $0x3a0] sm:$0xff]
    %v308 = vld [vmem:[#allocation6 + $0x3a8] sm:$0xff]
    %v309 = vld [vmem:[#allocation6 + $0x3b0] sm:$0xff]
    %v310 = vld [vmem:[#allocation6 + $0x3b8] sm:$0xff]
    %v311 = vld [vmem:[#allocation6 + $0x3c0] sm:$0xff]
    %v312 = vld [vmem:[#allocation6 + $0x3c8] sm:$0xff]
    %v313 = vld [vmem:[#allocation6 + $0x3d0] sm:$0xff]
    %v314 = vld [vmem:[#allocation6 + $0x3d8] sm:$0xff]
    %v315 = vld [vmem:[#allocation6 + $0x3e0] sm:$0xff]
    %v316 = vld [vmem:[#allocation6 + $0x3e8] sm:$0xff]
    %v317 = vld [vmem:[#allocation6 + $0x3f0] sm:$0xff]
    %v318 = vld [vmem:[#allocation6 + $0x3f8] sm:$0xff]
    %v319 = vld [vmem:[%s3] sm:$0xf]
    %v321 = vlaneseq
    %v322 = vshrl.u32 %v321, 7
    %v323 = vsub.s32 0, %v322
    %v324 = vrot.slane %v319, %v323
    %v325 = vlaneseq
    %v326 = vshrl.u32 %v325, 7
    %v327 = vsub.s32 1, %v326
    %v328 = vrot.slane %v319, %v327
    %v329 = vlaneseq
    %v330 = vshrl.u32 %v329, 7
    %v331 = vsub.s32 2, %v330
    %v332 = vrot.slane %v319, %v331
    %v333 = vlaneseq
    %v334 = vshrl.u32 %v333, 7
    %v335 = vsub.s32 3, %v334
    %v336 = vrot.slane %v319, %v335
    %v469 = vunpack.c.l.b16 %v191
    %v470 = vunpack.c.h.b16 %v191
    %v471 = vunpack.c.l.b16 %v192
    %v472 = vunpack.c.h.b16 %v192
    %v473 = vunpack.c.l.b16 %v193
    %v474 = vunpack.c.h.b16 %v193
    %v475 = vunpack.c.l.b16 %v194
    %v476 = vunpack.c.h.b16 %v194
    %v477 = vunpack.c.l.b16 %v195
    %v478 = vunpack.c.h.b16 %v195
    %v479 = vunpack.c.l.b16 %v196
    %v480 = vunpack.c.h.b16 %v196
    %v481 = vunpack.c.l.b16 %v197
    %v482 = vunpack.c.h.b16 %v197
    %v483 = vunpack.c.l.b16 %v198
    %v484 = vunpack.c.h.b16 %v198
    %v485 = vunpack.c.l.b16 %v199
    %v486 = vunpack.c.h.b16 %v199
    %v487 = vunpack.c.l.b16 %v200
    %v488 = vunpack.c.h.b16 %v200
    %v489 = vunpack.c.l.b16 %v201
    %v490 = vunpack.c.h.b16 %v201
    %v491 = vunpack.c.l.b16 %v202
    %v492 = vunpack.c.h.b16 %v202
    %v493 = vunpack.c.l.b16 %v203
    %v494 = vunpack.c.h.b16 %v203
    %v495 = vunpack.c.l.b16 %v204
    %v496 = vunpack.c.h.b16 %v204
    %v497 = vunpack.c.l.b16 %v205
    %v498 = vunpack.c.h.b16 %v205
    %v499 = vunpack.c.l.b16 %v206
    %v500 = vunpack.c.h.b16 %v206
    %v501 = vunpack.c.l.b16 %v207
    %v502 = vunpack.c.h.b16 %v207
    %v503 = vunpack.c.l.b16 %v208
    %v504 = vunpack.c.h.b16 %v208
    %v505 = vunpack.c.l.b16 %v209
    %v506 = vunpack.c.h.b16 %v209
    %v507 = vunpack.c.l.b16 %v210
    %v508 = vunpack.c.h.b16 %v210
    %v509 = vunpack.c.l.b16 %v211
    %v510 = vunpack.c.h.b16 %v211
    %v511 = vunpack.c.l.b16 %v212
    %v512 = vunpack.c.h.b16 %v212
    %v513 = vunpack.c.l.b16 %v213
    %v514 = vunpack.c.h.b16 %v213
    %v515 = vunpack.c.l.b16 %v214
    %v516 = vunpack.c.h.b16 %v214
    %v517 = vunpack.c.l.b16 %v215
    %v518 = vunpack.c.h.b16 %v215
    %v519 = vunpack.c.l.b16 %v216
    %v520 = vunpack.c.h.b16 %v216
    %v521 = vunpack.c.l.b16 %v217
    %v522 = vunpack.c.h.b16 %v217
    %v523 = vunpack.c.l.b16 %v218
    %v524 = vunpack.c.h.b16 %v218
    %v525 = vunpack.c.l.b16 %v219
    %v526 = vunpack.c.h.b16 %v219
    %v527 = vunpack.c.l.b16 %v220
    %v528 = vunpack.c.h.b16 %v220
    %v529 = vunpack.c.l.b16 %v221
    %v530 = vunpack.c.h.b16 %v221
    %v531 = vunpack.c.l.b16 %v222
    %v532 = vunpack.c.h.b16 %v222
    %v533 = vunpack.c.l.b16 %v223
    %v534 = vunpack.c.h.b16 %v223
    %v535 = vunpack.c.l.b16 %v224
    %v536 = vunpack.c.h.b16 %v224
    %v537 = vunpack.c.l.b16 %v225
    %v538 = vunpack.c.h.b16 %v225
    %v539 = vunpack.c.l.b16 %v226
    %v540 = vunpack.c.h.b16 %v226
    %v541 = vunpack.c.l.b16 %v227
    %v542 = vunpack.c.h.b16 %v227
    %v543 = vunpack.c.l.b16 %v228
    %v544 = vunpack.c.h.b16 %v228
    %v545 = vunpack.c.l.b16 %v229
    %v546 = vunpack.c.h.b16 %v229
    %v547 = vunpack.c.l.b16 %v230
    %v548 = vunpack.c.h.b16 %v230
    %v549 = vunpack.c.l.b16 %v231
    %v550 = vunpack.c.h.b16 %v231
    %v551 = vunpack.c.l.b16 %v232
    %v552 = vunpack.c.h.b16 %v232
    %v553 = vunpack.c.l.b16 %v233
    %v554 = vunpack.c.h.b16 %v233
    %v555 = vunpack.c.l.b16 %v234
    %v556 = vunpack.c.h.b16 %v234
    %v557 = vunpack.c.l.b16 %v235
    %v558 = vunpack.c.h.b16 %v235
    %v559 = vunpack.c.l.b16 %v236
    %v560 = vunpack.c.h.b16 %v236
    %v561 = vunpack.c.l.b16 %v237
    %v562 = vunpack.c.h.b16 %v237
    %v563 = vunpack.c.l.b16 %v238
    %v564 = vunpack.c.h.b16 %v238
    %v565 = vunpack.c.l.b16 %v239
    %v566 = vunpack.c.h.b16 %v239
    %v567 = vunpack.c.l.b16 %v240
    %v568 = vunpack.c.h.b16 %v240
    %v569 = vunpack.c.l.b16 %v241
    %v570 = vunpack.c.h.b16 %v241
    %v571 = vunpack.c.l.b16 %v242
    %v572 = vunpack.c.h.b16 %v242
    %v573 = vunpack.c.l.b16 %v243
    %v574 = vunpack.c.h.b16 %v243
    %v575 = vunpack.c.l.b16 %v244
    %v576 = vunpack.c.h.b16 %v244
    %v577 = vunpack.c.l.b16 %v245
    %v578 = vunpack.c.h.b16 %v245
    %v579 = vunpack.c.l.b16 %v246
    %v580 = vunpack.c.h.b16 %v246
    %v581 = vunpack.c.l.b16 %v247
    %v582 = vunpack.c.h.b16 %v247
    %v583 = vunpack.c.l.b16 %v248
    %v584 = vunpack.c.h.b16 %v248
    %v585 = vunpack.c.l.b16 %v249
    %v586 = vunpack.c.h.b16 %v249
    %v587 = vunpack.c.l.b16 %v250
    %v588 = vunpack.c.h.b16 %v250
    %v589 = vunpack.c.l.b16 %v251
    %v590 = vunpack.c.h.b16 %v251
    %v591 = vunpack.c.l.b16 %v252
    %v592 = vunpack.c.h.b16 %v252
    %v593 = vunpack.c.l.b16 %v253
    %v594 = vunpack.c.h.b16 %v253
    %v595 = vunpack.c.l.b16 %v254
    %v596 = vunpack.c.h.b16 %v254
    %v597 = vunpack.c.l.b16 %v255
    %v598 = vunpack.c.h.b16 %v255
    %v599 = vunpack.c.l.b16 %v256
    %v600 = vunpack.c.h.b16 %v256
    %v601 = vunpack.c.l.b16 %v257
    %v602 = vunpack.c.h.b16 %v257
    %v603 = vunpack.c.l.b16 %v258
    %v604 = vunpack.c.h.b16 %v258
    %v605 = vunpack.c.l.b16 %v259
    %v606 = vunpack.c.h.b16 %v259
    %v607 = vunpack.c.l.b16 %v260
    %v608 = vunpack.c.h.b16 %v260
    %v609 = vunpack.c.l.b16 %v261
    %v610 = vunpack.c.h.b16 %v261
    %v611 = vunpack.c.l.b16 %v262
    %v612 = vunpack.c.h.b16 %v262
    %v613 = vunpack.c.l.b16 %v263
    %v614 = vunpack.c.h.b16 %v263
    %v615 = vunpack.c.l.b16 %v264
    %v616 = vunpack.c.h.b16 %v264
    %v617 = vunpack.c.l.b16 %v265
    %v618 = vunpack.c.h.b16 %v265
    %v619 = vunpack.c.l.b16 %v266
    %v620 = vunpack.c.h.b16 %v266
    %v621 = vunpack.c.l.b16 %v267
    %v622 = vunpack.c.h.b16 %v267
    %v623 = vunpack.c.l.b16 %v268
    %v624 = vunpack.c.h.b16 %v268
    %v625 = vunpack.c.l.b16 %v269
    %v626 = vunpack.c.h.b16 %v269
    %v627 = vunpack.c.l.b16 %v270
    %v628 = vunpack.c.h.b16 %v270
    %v629 = vunpack.c.l.b16 %v271
    %v630 = vunpack.c.h.b16 %v271
    %v631 = vunpack.c.l.b16 %v272
    %v632 = vunpack.c.h.b16 %v272
    %v633 = vunpack.c.l.b16 %v273
    %v634 = vunpack.c.h.b16 %v273
    %v635 = vunpack.c.l.b16 %v274
    %v636 = vunpack.c.h.b16 %v274
    %v637 = vunpack.c.l.b16 %v275
    %v638 = vunpack.c.h.b16 %v275
    %v639 = vunpack.c.l.b16 %v276
    %v640 = vunpack.c.h.b16 %v276
    %v641 = vunpack.c.l.b16 %v277
    %v642 = vunpack.c.h.b16 %v277
    %v643 = vunpack.c.l.b16 %v278
    %v644 = vunpack.c.h.b16 %v278
    %v645 = vunpack.c.l.b16 %v279
    %v646 = vunpack.c.h.b16 %v279
    %v647 = vunpack.c.l.b16 %v280
    %v648 = vunpack.c.h.b16 %v280
    %v649 = vunpack.c.l.b16 %v281
    %v650 = vunpack.c.h.b16 %v281
    %v651 = vunpack.c.l.b16 %v282
    %v652 = vunpack.c.h.b16 %v282
    %v653 = vunpack.c.l.b16 %v283
    %v654 = vunpack.c.h.b16 %v283
    %v655 = vunpack.c.l.b16 %v284
    %v656 = vunpack.c.h.b16 %v284
    %v657 = vunpack.c.l.b16 %v285
    %v658 = vunpack.c.h.b16 %v285
    %v659 = vunpack.c.l.b16 %v286
    %v660 = vunpack.c.h.b16 %v286
    %v661 = vunpack.c.l.b16 %v287
    %v662 = vunpack.c.h.b16 %v287
    %v663 = vunpack.c.l.b16 %v288
    %v664 = vunpack.c.h.b16 %v288
    %v665 = vunpack.c.l.b16 %v289
    %v666 = vunpack.c.h.b16 %v289
    %v667 = vunpack.c.l.b16 %v290
    %v668 = vunpack.c.h.b16 %v290
    %v669 = vunpack.c.l.b16 %v291
    %v670 = vunpack.c.h.b16 %v291
    %v671 = vunpack.c.l.b16 %v292
    %v672 = vunpack.c.h.b16 %v292
    %v673 = vunpack.c.l.b16 %v293
    %v674 = vunpack.c.h.b16 %v293
    %v675 = vunpack.c.l.b16 %v294
    %v676 = vunpack.c.h.b16 %v294
    %v677 = vunpack.c.l.b16 %v295
    %v678 = vunpack.c.h.b16 %v295
    %v679 = vunpack.c.l.b16 %v296
    %v680 = vunpack.c.h.b16 %v296
    %v681 = vunpack.c.l.b16 %v297
    %v682 = vunpack.c.h.b16 %v297
    %v683 = vunpack.c.l.b16 %v298
    %v684 = vunpack.c.h.b16 %v298
    %v685 = vunpack.c.l.b16 %v299
    %v686 = vunpack.c.h.b16 %v299
    %v687 = vunpack.c.l.b16 %v300
    %v688 = vunpack.c.h.b16 %v300
    %v689 = vunpack.c.l.b16 %v301
    %v690 = vunpack.c.h.b16 %v301
    %v691 = vunpack.c.l.b16 %v302
    %v692 = vunpack.c.h.b16 %v302
    %v693 = vunpack.c.l.b16 %v303
    %v694 = vunpack.c.h.b16 %v303
    %v695 = vunpack.c.l.b16 %v304
    %v696 = vunpack.c.h.b16 %v304
    %v697 = vunpack.c.l.b16 %v305
    %v698 = vunpack.c.h.b16 %v305
    %v699 = vunpack.c.l.b16 %v306
    %v700 = vunpack.c.h.b16 %v306
    %v701 = vunpack.c.l.b16 %v307
    %v702 = vunpack.c.h.b16 %v307
    %v703 = vunpack.c.l.b16 %v308
    %v704 = vunpack.c.h.b16 %v308
    %v705 = vunpack.c.l.b16 %v309
    %v706 = vunpack.c.h.b16 %v309
    %v707 = vunpack.c.l.b16 %v310
    %v708 = vunpack.c.h.b16 %v310
    %v709 = vunpack.c.l.b16 %v311
    %v710 = vunpack.c.h.b16 %v311
    %v711 = vunpack.c.l.b16 %v312
    %v712 = vunpack.c.h.b16 %v312
    %v713 = vunpack.c.l.b16 %v313
    %v714 = vunpack.c.h.b16 %v313
    %v715 = vunpack.c.l.b16 %v314
    %v716 = vunpack.c.h.b16 %v314
    %v717 = vunpack.c.l.b16 %v315
    %v718 = vunpack.c.h.b16 %v315
    %v719 = vunpack.c.l.b16 %v316
    %v720 = vunpack.c.h.b16 %v316
    %v721 = vunpack.c.l.b16 %v317
    %v722 = vunpack.c.h.b16 %v317
    %v723 = vunpack.c.l.b16 %v318
    %v724 = vunpack.c.h.b16 %v318
    %v725 = vpack.c.b16 %v473, %v469
    %v726 = vpack.c.b16 %v474, %v470
    %v727 = vpack.c.b16 %v475, %v471
    %v728 = vpack.c.b16 %v476, %v472
    %v729 = vpack.c.b16 %v481, %v477
    %v730 = vpack.c.b16 %v482, %v478
    %v731 = vpack.c.b16 %v483, %v479
    %v732 = vpack.c.b16 %v484, %v480
    %v733 = vpack.c.b16 %v489, %v485
    %v734 = vpack.c.b16 %v490, %v486
    %v735 = vpack.c.b16 %v491, %v487
    %v736 = vpack.c.b16 %v492, %v488
    %v737 = vpack.c.b16 %v497, %v493
    %v738 = vpack.c.b16 %v498, %v494
    %v739 = vpack.c.b16 %v499, %v495
    %v740 = vpack.c.b16 %v500, %v496
    %v741 = vpack.c.b16 %v505, %v501
    %v742 = vpack.c.b16 %v506, %v502
    %v743 = vpack.c.b16 %v507, %v503
    %v744 = vpack.c.b16 %v508, %v504
    %v745 = vpack.c.b16 %v513, %v509
    %v746 = vpack.c.b16 %v514, %v510
    %v747 = vpack.c.b16 %v515, %v511
    %v748 = vpack.c.b16 %v516, %v512
    %v749 = vpack.c.b16 %v521, %v517
    %v750 = vpack.c.b16 %v522, %v518
    %v751 = vpack.c.b16 %v523, %v519
    %v752 = vpack.c.b16 %v524, %v520
    %v753 = vpack.c.b16 %v529, %v525
    %v754 = vpack.c.b16 %v530, %v526
    %v755 = vpack.c.b16 %v531, %v527
    %v756 = vpack.c.b16 %v532, %v528
    %v757 = vpack.c.b16 %v537, %v533
    %v758 = vpack.c.b16 %v538, %v534
    %v759 = vpack.c.b16 %v539, %v535
    %v760 = vpack.c.b16 %v540, %v536
    %v761 = vpack.c.b16 %v545, %v541
    %v762 = vpack.c.b16 %v546, %v542
    %v763 = vpack.c.b16 %v547, %v543
    %v764 = vpack.c.b16 %v548, %v544
    %v765 = vpack.c.b16 %v553, %v549
    %v766 = vpack.c.b16 %v554, %v550
    %v767 = vpack.c.b16 %v555, %v551
    %v768 = vpack.c.b16 %v556, %v552
    %v769 = vpack.c.b16 %v561, %v557
    %v770 = vpack.c.b16 %v562, %v558
    %v771 = vpack.c.b16 %v563, %v559
    %v772 = vpack.c.b16 %v564, %v560
    %v773 = vpack.c.b16 %v569, %v565
    %v774 = vpack.c.b16 %v570, %v566
    %v775 = vpack.c.b16 %v571, %v567
    %v776 = vpack.c.b16 %v572, %v568
    %v777 = vpack.c.b16 %v577, %v573
    %v778 = vpack.c.b16 %v578, %v574
    %v779 = vpack.c.b16 %v579, %v575
    %v780 = vpack.c.b16 %v580, %v576
    %v781 = vpack.c.b16 %v585, %v581
    %v782 = vpack.c.b16 %v586, %v582
    %v783 = vpack.c.b16 %v587, %v583
    %v784 = vpack.c.b16 %v588, %v584
    %v785 = vpack.c.b16 %v593, %v589
    %v786 = vpack.c.b16 %v594, %v590
    %v787 = vpack.c.b16 %v595, %v591
    %v788 = vpack.c.b16 %v596, %v592
    %v789 = vpack.c.b16 %v601, %v597
    %v790 = vpack.c.b16 %v602, %v598
    %v791 = vpack.c.b16 %v603, %v599
    %v792 = vpack.c.b16 %v604, %v600
    %v793 = vpack.c.b16 %v609, %v605
    %v794 = vpack.c.b16 %v610, %v606
    %v795 = vpack.c.b16 %v611, %v607
    %v796 = vpack.c.b16 %v612, %v608
    %v797 = vpack.c.b16 %v617, %v613
    %v798 = vpack.c.b16 %v618, %v614
    %v799 = vpack.c.b16 %v619, %v615
    %v800 = vpack.c.b16 %v620, %v616
    %v801 = vpack.c.b16 %v625, %v621
    %v802 = vpack.c.b16 %v626, %v622
    %v803 = vpack.c.b16 %v627, %v623
    %v804 = vpack.c.b16 %v628, %v624
    %v805 = vpack.c.b16 %v633, %v629
    %v806 = vpack.c.b16 %v634, %v630
    %v807 = vpack.c.b16 %v635, %v631
    %v808 = vpack.c.b16 %v636, %v632
    %v809 = vpack.c.b16 %v641, %v637
    %v810 = vpack.c.b16 %v642, %v638
    %v811 = vpack.c.b16 %v643, %v639
    %v812 = vpack.c.b16 %v644, %v640
    %v813 = vpack.c.b16 %v649, %v645
    %v814 = vpack.c.b16 %v650, %v646
    %v815 = vpack.c.b16 %v651, %v647
    %v816 = vpack.c.b16 %v652, %v648
    %v817 = vpack.c.b16 %v657, %v653
    %v818 = vpack.c.b16 %v658, %v654
    %v819 = vpack.c.b16 %v659, %v655
    %v820 = vpack.c.b16 %v660, %v656
    %v821 = vpack.c.b16 %v665, %v661
    %v822 = vpack.c.b16 %v666, %v662
    %v823 = vpack.c.b16 %v667, %v663
    %v824 = vpack.c.b16 %v668, %v664
    %v825 = vpack.c.b16 %v673, %v669
    %v826 = vpack.c.b16 %v674, %v670
    %v827 = vpack.c.b16 %v675, %v671
    %v828 = vpack.c.b16 %v676, %v672
    %v829 = vpack.c.b16 %v681, %v677
    %v830 = vpack.c.b16 %v682, %v678
    %v831 = vpack.c.b16 %v683, %v679
    %v832 = vpack.c.b16 %v684, %v680
    %v833 = vpack.c.b16 %v689, %v685
    %v834 = vpack.c.b16 %v690, %v686
    %v835 = vpack.c.b16 %v691, %v687
    %v836 = vpack.c.b16 %v692, %v688
    %v837 = vpack.c.b16 %v697, %v693
    %v838 = vpack.c.b16 %v698, %v694
    %v839 = vpack.c.b16 %v699, %v695
    %v840 = vpack.c.b16 %v700, %v696
    %v841 = vpack.c.b16 %v705, %v701
    %v842 = vpack.c.b16 %v706, %v702
    %v843 = vpack.c.b16 %v707, %v703
    %v844 = vpack.c.b16 %v708, %v704
    %v845 = vpack.c.b16 %v713, %v709
    %v846 = vpack.c.b16 %v714, %v710
    %v847 = vpack.c.b16 %v715, %v711
    %v848 = vpack.c.b16 %v716, %v712
    %v849 = vpack.c.b16 %v721, %v717
    %v850 = vpack.c.b16 %v722, %v718
    %v851 = vpack.c.b16 %v723, %v719
    %v852 = vpack.c.b16 %v724, %v720
    %981 = vmatprep.subr.bf16.mxu0 %v726
    %982 = vmatpush1.bf16.msra.mxu0 %v725
    %983 = vmatprep.subr.bf16.mxu0 %v730
    %984 = vmatpush1.bf16.msra.mxu0 %v729
    %985 = vmatprep.subr.bf16.mxu0 %v734
    %986 = vmatpush1.bf16.msra.mxu0 %v733
    %987 = vmatprep.subr.bf16.mxu0 %v738
    %988 = vmatpush1.bf16.msra.mxu0 %v737
    %989 = vmatprep.subr.bf16.mxu0 %v742
    %990 = vmatpush1.bf16.msra.mxu0 %v741
    %991 = vmatprep.subr.bf16.mxu0 %v746
    %992 = vmatpush1.bf16.msra.mxu0 %v745
    %993 = vmatprep.subr.bf16.mxu0 %v750
    %994 = vmatpush1.bf16.msra.mxu0 %v749
    %995 = vmatprep.subr.bf16.mxu0 %v754
    %996 = vmatpush1.bf16.msra.mxu0 %v753
    %997 = vmatprep.subr.bf16.mxu0 %v758
    %998 = vmatpush1.bf16.msra.mxu0 %v757
    %999 = vmatprep.subr.bf16.mxu0 %v762
    %1000 = vmatpush1.bf16.msra.mxu0 %v761
    %1001 = vmatprep.subr.bf16.mxu0 %v766
    %1002 = vmatpush1.bf16.msra.mxu0 %v765
    %1003 = vmatprep.subr.bf16.mxu0 %v770
    %1004 = vmatpush1.bf16.msra.mxu0 %v769
    %1005 = vmatprep.subr.bf16.mxu0 %v774
    %1006 = vmatpush1.bf16.msra.mxu0 %v773
    %1007 = vmatprep.subr.bf16.mxu0 %v778
    %1008 = vmatpush1.bf16.msra.mxu0 %v777
    %1009 = vmatprep.subr.bf16.mxu0 %v782
    %1010 = vmatpush1.bf16.msra.mxu0 %v781
    %1011 = vmatprep.subr.bf16.mxu0 %v786
    %1012 = vmatpush1.bf16.msra.mxu0 %v785
    %1013 = vmatprep.mubr.bf16.mxu0 %v183
    %1014 = vmatmul.mubr.bf16.gmra.mrb[0].mxu0 %v159
    %v1015 = vpop.f32.mrb[0].mxu0
    %v1016 = vadd.f32 %v324, %v1015
    %v1017 = vpop.f32.mrb[0].mxu0
    %v1018 = vadd.f32 %v328, %v1017
    %v1019 = vpop.f32.mrb[0].mxu0
    %v1020 = vadd.f32 %v324, %v1019
    %v1021 = vpop.f32.mrb[0].mxu0
    %v1022 = vadd.f32 %v328, %v1021
    %1023 = vmatprep.mubr.bf16.mxu0 %v184
    %1024 = vmatmul.mubr.bf16.gmra.mrb[0].mxu0 %v160
    %v1025 = vpop.f32.mrb[0].mxu0
    %v1026 = vadd.f32 %v324, %v1025
    %v1027 = vpop.f32.mrb[0].mxu0
    %v1028 = vadd.f32 %v328, %v1027
    %v1029 = vpop.f32.mrb[0].mxu0
    %v1030 = vadd.f32 %v324, %v1029
    %v1031 = vpop.f32.mrb[0].mxu0
    %v1032 = vadd.f32 %v328, %v1031
    %1033 = vmatprep.mubr.bf16.mxu0 %v185
    %1034 = vmatmul.mubr.bf16.gmra.mrb[0].mxu0 %v161
    %v1035 = vpop.f32.mrb[0].mxu0
    %v1036 = vadd.f32 %v324, %v1035
    %v1037 = vpop.f32.mrb[0].mxu0
    %v1038 = vadd.f32 %v328, %v1037
    %v1039 = vpop.f32.mrb[0].mxu0
    %v1040 = vadd.f32 %v324, %v1039
    %v1041 = vpop.f32.mrb[0].mxu0
    %v1042 = vadd.f32 %v328, %v1041
    %1043 = vmatprep.mubr.bf16.mxu0 %v186
    %1044 = vmatmul.mubr.bf16.gmra.mrb[0].mxu0 %v162
    %v1045 = vpop.f32.mrb[0].mxu0
    %v1046 = vadd.f32 %v324, %v1045
    %v1047 = vpop.f32.mrb[0].mxu0
    %v1048 = vadd.f32 %v328, %v1047
    %v1049 = vpop.f32.mrb[0].mxu0
    %v1050 = vadd.f32 %v324, %v1049
    %v1051 = vpop.f32.mrb[0].mxu0
    %v1052 = vadd.f32 %v328, %v1051
    %1053 = vdwg.mxu0
    %1054 = vmatprep.subr.bf16.mxu0 %v790
    %1055 = vmatpush1.bf16.msra.mxu0 %v789
    %1056 = vmatprep.subr.bf16.mxu0 %v794
    %1057 = vmatpush1.bf16.msra.mxu0 %v793
    %1058 = vmatprep.subr.bf16.mxu0 %v798
    %1059 = vmatpush1.bf16.msra.mxu0 %v797
    %1060 = vmatprep.subr.bf16.mxu0 %v802
    %1061 = vmatpush1.bf16.msra.mxu0 %v801
    %1062 = vmatprep.subr.bf16.mxu0 %v806
    %1063 = vmatpush1.bf16.msra.mxu0 %v805
    %1064 = vmatprep.subr.bf16.mxu0 %v810
    %1065 = vmatpush1.bf16.msra.mxu0 %v809
    %1066 = vmatprep.subr.bf16.mxu0 %v814
    %1067 = vmatpush1.bf16.msra.mxu0 %v813
    %1068 = vmatprep.subr.bf16.mxu0 %v818
    %1069 = vmatpush1.bf16.msra.mxu0 %v817
    %1070 = vmatprep.subr.bf16.mxu0 %v822
    %1071 = vmatpush1.bf16.msra.mxu0 %v821
    %1072 = vmatprep.subr.bf16.mxu0 %v826
    %1073 = vmatpush1.bf16.msra.mxu0 %v825
    %1074 = vmatprep.subr.bf16.mxu0 %v830
    %1075 = vmatpush1.bf16.msra.mxu0 %v829
    %1076 = vmatprep.subr.bf16.mxu0 %v834
    %1077 = vmatpush1.bf16.msra.mxu0 %v833
    %1078 = vmatprep.subr.bf16.mxu0 %v838
    %1079 = vmatpush1.bf16.msra.mxu0 %v837
    %1080 = vmatprep.subr.bf16.mxu0 %v842
    %1081 = vmatpush1.bf16.msra.mxu0 %v841
    %1082 = vmatprep.subr.bf16.mxu0 %v846
    %1083 = vmatpush1.bf16.msra.mxu0 %v845
    %1084 = vmatprep.subr.bf16.mxu0 %v850
    %1085 = vmatpush1.bf16.msra.mxu0 %v849
    %1086 = vmatprep.mubr.bf16.mxu0 %v139
    %1087 = vmatmul.mubr.bf16.gmra.mrb[0].mxu0 %v135
    %v1088 = vpop.f32.mrb[0].mxu0
    %v1089 = vadd.f32 %v1016, %v1088
    %v1090 = vpop.f32.mrb[0].mxu0
    %v1091 = vadd.f32 %v1018, %v1090
    %v1092 = vpop.f32.mrb[0].mxu0
    %v1093 = vadd.f32 %v1020, %v1092
    %v1094 = vpop.f32.mrb[0].mxu0
    %v1095 = vadd.f32 %v1022, %v1094
    %1096 = vmatprep.mubr.bf16.mxu0 %v140
    %1097 = vmatmul.mubr.bf16.gmra.mrb[0].mxu0 %v136
    %v1098 = vpop.f32.mrb[0].mxu0
    %v1099 = vadd.f32 %v1026, %v1098
    %v1100 = vpop.f32.mrb[0].mxu0
    %v1101 = vadd.f32 %v1028, %v1100
    %v1102 = vpop.f32.mrb[0].mxu0
    %v1103 = vadd.f32 %v1030, %v1102
    %v1104 = vpop.f32.mrb[0].mxu0
    %v1105 = vadd.f32 %v1032, %v1104
    %1106 = vmatprep.mubr.bf16.mxu0 %v141
    %1107 = vmatmul.mubr.bf16.gmra.mrb[0].mxu0 %v137
    %v1108 = vpop.f32.mrb[0].mxu0
    %v1109 = vadd.f32 %v1036, %v1108
    %v1110 = vpop.f32.mrb[0].mxu0
    %v1111 = vadd.f32 %v1038, %v1110
    %v1112 = vpop.f32.mrb[0].mxu0
    %v1113 = vadd.f32 %v1040, %v1112
    %v1114 = vpop.f32.mrb[0].mxu0
    %v1115 = vadd.f32 %v1042, %v1114
    %1116 = vmatprep.mubr.bf16.mxu0 %v142
    %1117 = vmatmul.mubr.bf16.gmra.mrb[0].mxu0 %v138
    %v1118 = vpop.f32.mrb[0].mxu0
    %v1119 = vadd.f32 %v1046, %v1118
    %v1120 = vpop.f32.mrb[0].mxu0
    %v1121 = vadd.f32 %v1048, %v1120
    %v1122 = vpop.f32.mrb[0].mxu0
    %v1123 = vadd.f32 %v1050, %v1122
    %v1124 = vpop.f32.mrb[0].mxu0
    %v1125 = vadd.f32 %v1052, %v1124
    %1126 = vdwg.mxu0
    %1127 = vmatprep.subr.bf16.mxu0 %v728
    %1128 = vmatpush1.bf16.msra.mxu0 %v727
    %1129 = vmatprep.subr.bf16.mxu0 %v732
    %1130 = vmatpush1.bf16.msra.mxu0 %v731
    %1131 = vmatprep.subr.bf16.mxu0 %v736
    %1132 = vmatpush1.bf16.msra.mxu0 %v735
    %1133 = vmatprep.subr.bf16.mxu0 %v740
    %1134 = vmatpush1.bf16.msra.mxu0 %v739
    %1135 = vmatprep.subr.bf16.mxu0 %v744
    %1136 = vmatpush1.bf16.msra.mxu0 %v743
    %1137 = vmatprep.subr.bf16.mxu0 %v748
    %1138 = vmatpush1.bf16.msra.mxu0 %v747
    %1139 = vmatprep.subr.bf16.mxu0 %v752
    %1140 = vmatpush1.bf16.msra.mxu0 %v751
    %1141 = vmatprep.subr.bf16.mxu0 %v756
    %1142 = vmatpush1.bf16.msra.mxu0 %v755
    %1143 = vmatprep.subr.bf16.mxu0 %v760
    %1144 = vmatpush1.bf16.msra.mxu0 %v759
    %1145 = vmatprep.subr.bf16.mxu0 %v764
    %1146 = vmatpush1.bf16.msra.mxu0 %v763
    %1147 = vmatprep.subr.bf16.mxu0 %v768
    %1148 = vmatpush1.bf16.msra.mxu0 %v767
    %1149 = vmatprep.subr.bf16.mxu0 %v772
    %1150 = vmatpush1.bf16.msra.mxu0 %v771
    %1151 = vmatprep.subr.bf16.mxu0 %v776
    %1152 = vmatpush1.bf16.msra.mxu0 %v775
    %1153 = vmatprep.subr.bf16.mxu0 %v780
    %1154 = vmatpush1.bf16.msra.mxu0 %v779
    %1155 = vmatprep.subr.bf16.mxu0 %v784
    %1156 = vmatpush1.bf16.msra.mxu0 %v783
    %1157 = vmatprep.subr.bf16.mxu0 %v788
    %1158 = vmatpush1.bf16.msra.mxu0 %v787
    %1159 = vmatprep.mubr.bf16.mxu0 %v183
    %1160 = vmatmul.mubr.bf16.gmra.mrb[0].mxu0 %v159
    %v1161 = vpop.f32.mrb[0].mxu0
    %v1162 = vadd.f32 %v332, %v1161
    %v1163 = vpop.f32.mrb[0].mxu0
    %v1164 = vadd.f32 %v336, %v1163
    %v1165 = vpop.f32.mrb[0].mxu0
    %v1166 = vadd.f32 %v332, %v1165
    %v1167 = vpop.f32.mrb[0].mxu0
    %v1168 = vadd.f32 %v336, %v1167
    %1169 = vmatprep.mubr.bf16.mxu0 %v184
    %1170 = vmatmul.mubr.bf16.gmra.mrb[0].mxu0 %v160
    %v1171 = vpop.f32.mrb[0].mxu0
    %v1172 = vadd.f32 %v332, %v1171
    %v1173 = vpop.f32.mrb[0].mxu0
    %v1174 = vadd.f32 %v336, %v1173
    %v1175 = vpop.f32.mrb[0].mxu0
    %v1176 = vadd.f32 %v332, %v1175
    %v1177 = vpop.f32.mrb[0].mxu0
    %v1178 = vadd.f32 %v336, %v1177
    %1179 = vmatprep.mubr.bf16.mxu0 %v185
    %1180 = vmatmul.mubr.bf16.gmra.mrb[0].mxu0 %v161
    %v1181 = vpop.f32.mrb[0].mxu0
    %v1182 = vadd.f32 %v332, %v1181
    %v1183 = vpop.f32.mrb[0].mxu0
    %v1184 = vadd.f32 %v336, %v1183
    %v1185 = vpop.f32.mrb[0].mxu0
    %v1186 = vadd.f32 %v332, %v1185
    %v1187 = vpop.f32.mrb[0].mxu0
    %v1188 = vadd.f32 %v336, %v1187
    %1189 = vmatprep.mubr.bf16.mxu0 %v186
    %1190 = vmatmul.mubr.bf16.gmra.mrb[0].mxu0 %v162
    %v1191 = vpop.f32.mrb[0].mxu0
    %v1192 = vadd.f32 %v332, %v1191
    %v1193 = vpop.f32.mrb[0].mxu0
    %v1194 = vadd.f32 %v336, %v1193
    %v1195 = vpop.f32.mrb[0].mxu0
    %v1196 = vadd.f32 %v332, %v1195
    %v1197 = vpop.f32.mrb[0].mxu0
    %v1198 = vadd.f32 %v336, %v1197
    %1199 = vdwg.mxu0
    %1200 = vmatprep.subr.bf16.mxu0 %v792
    %1201 = vmatpush1.bf16.msra.mxu0 %v791
    %1202 = vmatprep.subr.bf16.mxu0 %v796
    %1203 = vmatpush1.bf16.msra.mxu0 %v795
    %1204 = vmatprep.subr.bf16.mxu0 %v800
    %1205 = vmatpush1.bf16.msra.mxu0 %v799
    %1206 = vmatprep.subr.bf16.mxu0 %v804
    %1207 = vmatpush1.bf16.msra.mxu0 %v803
    %1208 = vmatprep.subr.bf16.mxu0 %v808
    %1209 = vmatpush1.bf16.msra.mxu0 %v807
    %1210 = vmatprep.subr.bf16.mxu0 %v812
    %1211 = vmatpush1.bf16.msra.mxu0 %v811
    %1212 = vmatprep.subr.bf16.mxu0 %v816
    %1213 = vmatpush1.bf16.msra.mxu0 %v815
    %1214 = vmatprep.subr.bf16.mxu0 %v820
    %1215 = vmatpush1.bf16.msra.mxu0 %v819
    %1216 = vmatprep.subr.bf16.mxu0 %v824
    %1217 = vmatpush1.bf16.msra.mxu0 %v823
    %1218 = vmatprep.subr.bf16.mxu0 %v828
    %1219 = vmatpush1.bf16.msra.mxu0 %v827
    %1220 = vmatprep.subr.bf16.mxu0 %v832
    %1221 = vmatpush1.bf16.msra.mxu0 %v831
    %1222 = vmatprep.subr.bf16.mxu0 %v836
    %1223 = vmatpush1.bf16.msra.mxu0 %v835
    %1224 = vmatprep.subr.bf16.mxu0 %v840
    %1225 = vmatpush1.bf16.msra.mxu0 %v839
    %1226 = vmatprep.subr.bf16.mxu0 %v844
    %1227 = vmatpush1.bf16.msra.mxu0 %v843
    %1228 = vmatprep.subr.bf16.mxu0 %v848
    %1229 = vmatpush1.bf16.msra.mxu0 %v847
    %1230 = vmatprep.subr.bf16.mxu0 %v852
    %1231 = vmatpush1.bf16.msra.mxu0 %v851
    %1232 = vmatprep.mubr.bf16.mxu0 %v139
    %1233 = vmatmul.mubr.bf16.gmra.mrb[0].mxu0 %v135
    %v1234 = vpop.f32.mrb[0].mxu0
    %v1235 = vadd.f32 %v1162, %v1234
    %v1236 = vpop.f32.mrb[0].mxu0
    %v1237 = vadd.f32 %v1164, %v1236
    %v1238 = vpop.f32.mrb[0].mxu0
    %v1239 = vadd.f32 %v1166, %v1238
    %v1240 = vpop.f32.mrb[0].mxu0
    %v1241 = vadd.f32 %v1168, %v1240
    %1242 = vmatprep.mubr.bf16.mxu0 %v140
    %1243 = vmatmul.mubr.bf16.gmra.mrb[0].mxu0 %v136
    %v1244 = vpop.f32.mrb[0].mxu0
    %v1245 = vadd.f32 %v1172, %v1244
    %v1246 = vpop.f32.mrb[0].mxu0
    %v1247 = vadd.f32 %v1174, %v1246
    %v1248 = vpop.f32.mrb[0].mxu0
    %v1249 = vadd.f32 %v1176, %v1248
    %v1250 = vpop.f32.mrb[0].mxu0
    %v1251 = vadd.f32 %v1178, %v1250
    %1252 = vmatprep.mubr.bf16.mxu0 %v141
    %1253 = vmatmul.mubr.bf16.gmra.mrb[0].mxu0 %v137
    %v1254 = vpop.f32.mrb[0].mxu0
    %v1255 = vadd.f32 %v1182, %v1254
    %v1256 = vpop.f32.mrb[0].mxu0
    %v1257 = vadd.f32 %v1184, %v1256
    %v1258 = vpop.f32.mrb[0].mxu0
    %v1259 = vadd.f32 %v1186, %v1258
    %v1260 = vpop.f32.mrb[0].mxu0
    %v1261 = vadd.f32 %v1188, %v1260
    %1262 = vmatprep.mubr.bf16.mxu0 %v142
    %1263 = vmatmul.mubr.bf16.gmra.mrb[0].mxu0 %v138
    %v1264 = vpop.f32.mrb[0].mxu0
    %v1265 = vadd.f32 %v1192, %v1264
    %v1266 = vpop.f32.mrb[0].mxu0
    %v1267 = vadd.f32 %v1194, %v1266
    %v1268 = vpop.f32.mrb[0].mxu0
    %v1269 = vadd.f32 %v1196, %v1268
    %v1270 = vpop.f32.mrb[0].mxu0
    %v1271 = vadd.f32 %v1198, %v1270
    %1272 = vdwg.mxu0
    %v1273 = vtanh.pop %v1089
    %v1274 = vtanh.pop %v1091
    %v1275 = vtanh.pop %v1235
    %v1276 = vtanh.pop %v1237
    %v1277 = vtanh.pop %v1093
    %v1278 = vtanh.pop %v1095
    %v1279 = vtanh.pop %v1239
    %v1280 = vtanh.pop %v1241
    %v1281 = vtanh.pop %v1099
    %v1282 = vtanh.pop %v1101
    %v1283 = vtanh.pop %v1245
    %v1284 = vtanh.pop %v1247
    %v1285 = vtanh.pop %v1103
    %v1286 = vtanh.pop %v1105
    %v1287 = vtanh.pop %v1249
    %v1288 = vtanh.pop %v1251
    %v1289 = vtanh.pop %v1109
    %v1290 = vtanh.pop %v1111
    %v1291 = vtanh.pop %v1255
    %v1292 = vtanh.pop %v1257
    %v1293 = vtanh.pop %v1113
    %v1294 = vtanh.pop %v1115
    %v1295 = vtanh.pop %v1259
    %v1296 = vtanh.pop %v1261
    %v1297 = vtanh.pop %v1119
    %v1298 = vtanh.pop %v1121
    %v1299 = vtanh.pop %v1265
    %v1300 = vtanh.pop %v1267
    %v1301 = vtanh.pop %v1123
    %v1302 = vtanh.pop %v1125
    %v1303 = vtanh.pop %v1269
    %v1304 = vtanh.pop %v1271
    %v1305 = vpack.c.bf16 %v1277, %v1273
    %v1306 = vpack.c.bf16 %v1278, %v1274
    %v1307 = vpack.c.bf16 %v1279, %v1275
    %v1308 = vpack.c.bf16 %v1280, %v1276
    %v1309 = vpack.c.bf16 %v1285, %v1281
    %v1310 = vpack.c.bf16 %v1286, %v1282
    %v1311 = vpack.c.bf16 %v1287, %v1283
    %v1312 = vpack.c.bf16 %v1288, %v1284
    %v1313 = vpack.c.bf16 %v1293, %v1289
    %v1314 = vpack.c.bf16 %v1294, %v1290
    %v1315 = vpack.c.bf16 %v1295, %v1291
    %v1316 = vpack.c.bf16 %v1296, %v1292
    %v1317 = vpack.c.bf16 %v1301, %v1297
    %v1318 = vpack.c.bf16 %v1302, %v1298
    %v1319 = vpack.c.bf16 %v1303, %v1299
    %v1320 = vpack.c.bf16 %v1304, %v1300
    %v1321 = vld [vmem:[#allocation7] sm:$0xf]
    %v1322 = vld [vmem:[#allocation7 + $0x4] sm:$0xf]
    %v1323 = vld [vmem:[#allocation7 + $0x8] sm:$0xf]
    %v1324 = vld [vmem:[#allocation7 + $0xc] sm:$0xf]
    %v1325 = vld [vmem:[#allocation7 + $0x10] sm:$0xf]
    %v1326 = vld [vmem:[#allocation7 + $0x14] sm:$0xf]
    %v1327 = vld [vmem:[#allocation7 + $0x18] sm:$0xf]
    %v1328 = vld [vmem:[#allocation7 + $0x1c] sm:$0xf]
    %v1329 = vld [vmem:[#allocation7 + $0x20] sm:$0xf]
    %v1330 = vld [vmem:[#allocation7 + $0x24] sm:$0xf]
    %v1331 = vld [vmem:[#allocation7 + $0x28] sm:$0xf]
    %v1332 = vld [vmem:[#allocation7 + $0x2c] sm:$0xf]
    %v1333 = vld [vmem:[#allocation7 + $0x30] sm:$0xf]
    %v1334 = vld [vmem:[#allocation7 + $0x34] sm:$0xf]
    %v1335 = vld [vmem:[#allocation7 + $0x38] sm:$0xf]
    %v1336 = vld [vmem:[#allocation7 + $0x3c] sm:$0xf]
    %v1337 = vld [vmem:[#allocation7 + $0x40] sm:$0xf]
    %v1338 = vld [vmem:[#allocation7 + $0x44] sm:$0xf]
    %v1339 = vld [vmem:[#allocation7 + $0x48] sm:$0xf]
    %v1340 = vld [vmem:[#allocation7 + $0x4c] sm:$0xf]
    %v1341 = vld [vmem:[#allocation7 + $0x50] sm:$0xf]
    %v1342 = vld [vmem:[#allocation7 + $0x54] sm:$0xf]
    %v1343 = vld [vmem:[#allocation7 + $0x58] sm:$0xf]
    %v1344 = vld [vmem:[#allocation7 + $0x5c] sm:$0xf]
    %v1345 = vld [vmem:[#allocation7 + $0x60] sm:$0xf]
    %v1346 = vld [vmem:[#allocation7 + $0x64] sm:$0xf]
    %v1347 = vld [vmem:[#allocation7 + $0x68] sm:$0xf]
    %v1348 = vld [vmem:[#allocation7 + $0x6c] sm:$0xf]
    %v1349 = vld [vmem:[#allocation7 + $0x70] sm:$0xf]
    %v1350 = vld [vmem:[#allocation7 + $0x74] sm:$0xf]
    %v1351 = vld [vmem:[#allocation7 + $0x78] sm:$0xf]
    %v1352 = vld [vmem:[#allocation7 + $0x7c] sm:$0xf]
    %v1353 = vld [vmem:[#allocation7 + $0x80] sm:$0xf]
    %v1354 = vld [vmem:[#allocation7 + $0x84] sm:$0xf]
    %v1355 = vld [vmem:[#allocation7 + $0x88] sm:$0xf]
    %v1356 = vld [vmem:[#allocation7 + $0x8c] sm:$0xf]
    %v1357 = vld [vmem:[#allocation7 + $0x90] sm:$0xf]
    %v1358 = vld [vmem:[#allocation7 + $0x94] sm:$0xf]
    %v1359 = vld [vmem:[#allocation7 + $0x98] sm:$0xf]
    %v1360 = vld [vmem:[#allocation7 + $0x9c] sm:$0xf]
    %v1361 = vld [vmem:[#allocation7 + $0xa0] sm:$0xf]
    %v1362 = vld [vmem:[#allocation7 + $0xa4] sm:$0xf]
    %v1363 = vld [vmem:[#allocation7 + $0xa8] sm:$0xf]
    %v1364 = vld [vmem:[#allocation7 + $0xac] sm:$0xf]
    %v1365 = vld [vmem:[#allocation7 + $0xb0] sm:$0xf]
    %v1366 = vld [vmem:[#allocation7 + $0xb4] sm:$0xf]
    %v1367 = vld [vmem:[#allocation7 + $0xb8] sm:$0xf]
    %v1368 = vld [vmem:[#allocation7 + $0xbc] sm:$0xf]
    %v1369 = vld [vmem:[#allocation7 + $0xc0] sm:$0xf]
    %v1370 = vld [vmem:[#allocation7 + $0xc4] sm:$0xf]
    %v1371 = vld [vmem:[#allocation7 + $0xc8] sm:$0xf]
    %v1372 = vld [vmem:[#allocation7 + $0xcc] sm:$0xf]
    %v1373 = vld [vmem:[#allocation7 + $0xd0] sm:$0xf]
    %v1374 = vld [vmem:[#allocation7 + $0xd4] sm:$0xf]
    %v1375 = vld [vmem:[#allocation7 + $0xd8] sm:$0xf]
    %v1376 = vld [vmem:[#allocation7 + $0xdc] sm:$0xf]
    %v1377 = vld [vmem:[#allocation7 + $0xe0] sm:$0xf]
    %v1378 = vld [vmem:[#allocation7 + $0xe4] sm:$0xf]
    %v1379 = vld [vmem:[#allocation7 + $0xe8] sm:$0xf]
    %v1380 = vld [vmem:[#allocation7 + $0xec] sm:$0xf]
    %v1381 = vld [vmem:[#allocation7 + $0xf0] sm:$0xf]
    %v1382 = vld [vmem:[#allocation7 + $0xf4] sm:$0xf]
    %v1383 = vld [vmem:[#allocation7 + $0xf8] sm:$0xf]
    %v1384 = vld [vmem:[#allocation7 + $0xfc] sm:$0xf]
    %v1385 = vld [vmem:[%s5] sm:$0x1]
    %v1387 = vlaneseq
    %v1388 = vshrl.u32 %v1387, 7
    %v1389 = vsub.s32 0, %v1388
    %v1390 = vrot.slane %v1385, %v1389
    %v1456 = vunpack.c.l.b16 %v1321
    %v1457 = vunpack.c.l.b16 %v1322
    %v1458 = vunpack.c.l.b16 %v1323
    %v1459 = vunpack.c.l.b16 %v1324
    %v1460 = vunpack.c.l.b16 %v1325
    %v1461 = vunpack.c.l.b16 %v1326
    %v1462 = vunpack.c.l.b16 %v1327
    %v1463 = vunpack.c.l.b16 %v1328
    %v1464 = vunpack.c.l.b16 %v1329
    %v1465 = vunpack.c.l.b16 %v1330
    %v1466 = vunpack.c.l.b16 %v1331
    %v1467 = vunpack.c.l.b16 %v1332
    %v1468 = vunpack.c.l.b16 %v1333
    %v1469 = vunpack.c.l.b16 %v1334
    %v1470 = vunpack.c.l.b16 %v1335
    %v1471 = vunpack.c.l.b16 %v1336
    %v1472 = vunpack.c.l.b16 %v1337
    %v1473 = vunpack.c.l.b16 %v1338
    %v1474 = vunpack.c.l.b16 %v1339
    %v1475 = vunpack.c.l.b16 %v1340
    %v1476 = vunpack.c.l.b16 %v1341
    %v1477 = vunpack.c.l.b16 %v1342
    %v1478 = vunpack.c.l.b16 %v1343
    %v1479 = vunpack.c.l.b16 %v1344
    %v1480 = vunpack.c.l.b16 %v1345
    %v1481 = vunpack.c.l.b16 %v1346
    %v1482 = vunpack.c.l.b16 %v1347
    %v1483 = vunpack.c.l.b16 %v1348
    %v1484 = vunpack.c.l.b16 %v1349
    %v1485 = vunpack.c.l.b16 %v1350
    %v1486 = vunpack.c.l.b16 %v1351
    %v1487 = vunpack.c.l.b16 %v1352
    %v1488 = vunpack.c.l.b16 %v1353
    %v1489 = vunpack.c.l.b16 %v1354
    %v1490 = vunpack.c.l.b16 %v1355
    %v1491 = vunpack.c.l.b16 %v1356
    %v1492 = vunpack.c.l.b16 %v1357
    %v1493 = vunpack.c.l.b16 %v1358
    %v1494 = vunpack.c.l.b16 %v1359
    %v1495 = vunpack.c.l.b16 %v1360
    %v1496 = vunpack.c.l.b16 %v1361
    %v1497 = vunpack.c.l.b16 %v1362
    %v1498 = vunpack.c.l.b16 %v1363
    %v1499 = vunpack.c.l.b16 %v1364
    %v1500 = vunpack.c.l.b16 %v1365
    %v1501 = vunpack.c.l.b16 %v1366
    %v1502 = vunpack.c.l.b16 %v1367
    %v1503 = vunpack.c.l.b16 %v1368
    %v1504 = vunpack.c.l.b16 %v1369
    %v1505 = vunpack.c.l.b16 %v1370
    %v1506 = vunpack.c.l.b16 %v1371
    %v1507 = vunpack.c.l.b16 %v1372
    %v1508 = vunpack.c.l.b16 %v1373
    %v1509 = vunpack.c.l.b16 %v1374
    %v1510 = vunpack.c.l.b16 %v1375
    %v1511 = vunpack.c.l.b16 %v1376
    %v1512 = vunpack.c.l.b16 %v1377
    %v1513 = vunpack.c.l.b16 %v1378
    %v1514 = vunpack.c.l.b16 %v1379
    %v1515 = vunpack.c.l.b16 %v1380
    %v1516 = vunpack.c.l.b16 %v1381
    %v1517 = vunpack.c.l.b16 %v1382
    %v1518 = vunpack.c.l.b16 %v1383
    %v1519 = vunpack.c.l.b16 %v1384
    %v1520 = vpack.c.b16 %v1457, %v1456
    %v1521 = vpack.c.b16 %v1459, %v1458
    %v1522 = vpack.c.b16 %v1461, %v1460
    %v1523 = vpack.c.b16 %v1463, %v1462
    %v1524 = vpack.c.b16 %v1465, %v1464
    %v1525 = vpack.c.b16 %v1467, %v1466
    %v1526 = vpack.c.b16 %v1469, %v1468
    %v1527 = vpack.c.b16 %v1471, %v1470
    %v1528 = vpack.c.b16 %v1473, %v1472
    %v1529 = vpack.c.b16 %v1475, %v1474
    %v1530 = vpack.c.b16 %v1477, %v1476
    %v1531 = vpack.c.b16 %v1479, %v1478
    %v1532 = vpack.c.b16 %v1481, %v1480
    %v1533 = vpack.c.b16 %v1483, %v1482
    %v1534 = vpack.c.b16 %v1485, %v1484
    %v1535 = vpack.c.b16 %v1487, %v1486
    %v1536 = vpack.c.b16 %v1489, %v1488
    %v1537 = vpack.c.b16 %v1491, %v1490
    %v1538 = vpack.c.b16 %v1493, %v1492
    %v1539 = vpack.c.b16 %v1495, %v1494
    %v1540 = vpack.c.b16 %v1497, %v1496
    %v1541 = vpack.c.b16 %v1499, %v1498
    %v1542 = vpack.c.b16 %v1501, %v1500
    %v1543 = vpack.c.b16 %v1503, %v1502
    %v1544 = vpack.c.b16 %v1505, %v1504
    %v1545 = vpack.c.b16 %v1507, %v1506
    %v1546 = vpack.c.b16 %v1509, %v1508
    %v1547 = vpack.c.b16 %v1511, %v1510
    %v1548 = vpack.c.b16 %v1513, %v1512
    %v1549 = vpack.c.b16 %v1515, %v1514
    %v1550 = vpack.c.b16 %v1517, %v1516
    %v1551 = vpack.c.b16 %v1519, %v1518
    %1584 = vmatprep.subr.bf16.mxu0 0
    %1585 = vmatpush1.bf16.msra.mxu0 %v1520
    %1586 = vmatprep.subr.bf16.mxu0 0
    %1587 = vmatpush1.bf16.msra.mxu0 %v1521
    %1588 = vmatprep.subr.bf16.mxu0 0
    %1589 = vmatpush1.bf16.msra.mxu0 %v1522
    %1590 = vmatprep.subr.bf16.mxu0 0
    %1591 = vmatpush1.bf16.msra.mxu0 %v1523
    %1592 = vmatprep.subr.bf16.mxu0 0
    %1593 = vmatpush1.bf16.msra.mxu0 %v1524
    %1594 = vmatprep.subr.bf16.mxu0 0
    %1595 = vmatpush1.bf16.msra.mxu0 %v1525
    %1596 = vmatprep.subr.bf16.mxu0 0
    %1597 = vmatpush1.bf16.msra.mxu0 %v1526
    %1598 = vmatprep.subr.bf16.mxu0 0
    %1599 = vmatpush1.bf16.msra.mxu0 %v1527
    %1600 = vmatprep.subr.bf16.mxu0 0
    %1601 = vmatpush1.bf16.msra.mxu0 %v1528
    %1602 = vmatprep.subr.bf16.mxu0 0
    %1603 = vmatpush1.bf16.msra.mxu0 %v1529
    %1604 = vmatprep.subr.bf16.mxu0 0
    %1605 = vmatpush1.bf16.msra.mxu0 %v1530
    %1606 = vmatprep.subr.bf16.mxu0 0
    %1607 = vmatpush1.bf16.msra.mxu0 %v1531
    %1608 = vmatprep.subr.bf16.mxu0 0
    %1609 = vmatpush1.bf16.msra.mxu0 %v1532
    %1610 = vmatprep.subr.bf16.mxu0 0
    %1611 = vmatpush1.bf16.msra.mxu0 %v1533
    %1612 = vmatprep.subr.bf16.mxu0 0
    %1613 = vmatpush1.bf16.msra.mxu0 %v1534
    %1614 = vmatprep.subr.bf16.mxu0 0
    %1615 = vmatpush1.bf16.msra.mxu0 %v1535
    %1616 = vmatprep.mubr.bf16.mxu0 %v1306
    %1617 = vmatmul.mubr.bf16.gmra.mrb[0].mxu0 %v1305
    %v1618 = vpop.f32.mrb[0].mxu0
    %v1619 = vadd.f32 %v1390, %v1618
    %v1620 = vpop.f32.mrb[0].mxu0
    %v1621 = vpop.f32.mrb[0].mxu0
    %v1622 = vadd.f32 %v1390, %v1621
    %v1623 = vpop.f32.mrb[0].mxu0
    %1624 = vmatprep.mubr.bf16.mxu0 %v1310
    %1625 = vmatmul.mubr.bf16.gmra.mrb[0].mxu0 %v1309
    %v1626 = vpop.f32.mrb[0].mxu0
    %v1627 = vadd.f32 %v1390, %v1626
    %v1628 = vpop.f32.mrb[0].mxu0
    %v1629 = vpop.f32.mrb[0].mxu0
    %v1630 = vadd.f32 %v1390, %v1629
    %v1631 = vpop.f32.mrb[0].mxu0
    %1632 = vmatprep.mubr.bf16.mxu0 %v1314
    %1633 = vmatmul.mubr.bf16.gmra.mrb[0].mxu0 %v1313
    %v1634 = vpop.f32.mrb[0].mxu0
    %v1635 = vadd.f32 %v1390, %v1634
    %v1636 = vpop.f32.mrb[0].mxu0
    %v1637 = vpop.f32.mrb[0].mxu0
    %v1638 = vadd.f32 %v1390, %v1637
    %v1639 = vpop.f32.mrb[0].mxu0
    %1640 = vmatprep.mubr.bf16.mxu0 %v1318
    %1641 = vmatmul.mubr.bf16.gmra.mrb[0].mxu0 %v1317
    %v1642 = vpop.f32.mrb[0].mxu0
    %v1643 = vadd.f32 %v1390, %v1642
    %v1644 = vpop.f32.mrb[0].mxu0
    %v1645 = vpop.f32.mrb[0].mxu0
    %v1646 = vadd.f32 %v1390, %v1645
    %v1647 = vpop.f32.mrb[0].mxu0
    %1648 = vdwg.mxu0
    %1649 = vmatprep.subr.bf16.mxu0 0
    %1650 = vmatpush1.bf16.msra.mxu0 %v1536
    %1651 = vmatprep.subr.bf16.mxu0 0
    %1652 = vmatpush1.bf16.msra.mxu0 %v1537
    %1653 = vmatprep.subr.bf16.mxu0 0
    %1654 = vmatpush1.bf16.msra.mxu0 %v1538
    %1655 = vmatprep.subr.bf16.mxu0 0
    %1656 = vmatpush1.bf16.msra.mxu0 %v1539
    %1657 = vmatprep.subr.bf16.mxu0 0
    %1658 = vmatpush1.bf16.msra.mxu0 %v1540
    %1659 = vmatprep.subr.bf16.mxu0 0
    %1660 = vmatpush1.bf16.msra.mxu0 %v1541
    %1661 = vmatprep.subr.bf16.mxu0 0
    %1662 = vmatpush1.bf16.msra.mxu0 %v1542
    %1663 = vmatprep.subr.bf16.mxu0 0
    %1664 = vmatpush1.bf16.msra.mxu0 %v1543
    %1665 = vmatprep.subr.bf16.mxu0 0
    %1666 = vmatpush1.bf16.msra.mxu0 %v1544
    %1667 = vmatprep.subr.bf16.mxu0 0
    %1668 = vmatpush1.bf16.msra.mxu0 %v1545
    %1669 = vmatprep.subr.bf16.mxu0 0
    %1670 = vmatpush1.bf16.msra.mxu0 %v1546
    %1671 = vmatprep.subr.bf16.mxu0 0
    %1672 = vmatpush1.bf16.msra.mxu0 %v1547
    %1673 = vmatprep.subr.bf16.mxu0 0
    %1674 = vmatpush1.bf16.msra.mxu0 %v1548
    %1675 = vmatprep.subr.bf16.mxu0 0
    %1676 = vmatpush1.bf16.msra.mxu0 %v1549
    %1677 = vmatprep.subr.bf16.mxu0 0
    %1678 = vmatpush1.bf16.msra.mxu0 %v1550
    %1679 = vmatprep.subr.bf16.mxu0 0
    %1680 = vmatpush1.bf16.msra.mxu0 %v1551
    %1681 = vmatprep.mubr.bf16.mxu0 %v1308
    %1682 = vmatmul.mubr.bf16.gmra.mrb[0].mxu0 %v1307
    %v1683 = vpop.f32.mrb[0].mxu0
    %v1684 = vadd.f32 %v1619, %v1683
    %v1685 = vpop.f32.mrb[0].mxu0
    %v1686 = vpop.f32.mrb[0].mxu0
    %v1687 = vadd.f32 %v1622, %v1686
    %v1688 = vpop.f32.mrb[0].mxu0
    %1689 = vmatprep.mubr.bf16.mxu0 %v1312
    %1690 = vmatmul.mubr.bf16.gmra.mrb[0].mxu0 %v1311
    %v1691 = vpop.f32.mrb[0].mxu0
    %v1692 = vadd.f32 %v1627, %v1691
    %v1693 = vpop.f32.mrb[0].mxu0
    %v1694 = vpop.f32.mrb[0].mxu0
    %v1695 = vadd.f32 %v1630, %v1694
    %v1696 = vpop.f32.mrb[0].mxu0
    %1697 = vmatprep.mubr.bf16.mxu0 %v1316
    %1698 = vmatmul.mubr.bf16.gmra.mrb[0].mxu0 %v1315
    %v1699 = vpop.f32.mrb[0].mxu0
    %v1700 = vadd.f32 %v1635, %v1699
    %v1701 = vpop.f32.mrb[0].mxu0
    %v1702 = vpop.f32.mrb[0].mxu0
    %v1703 = vadd.f32 %v1638, %v1702
    %v1704 = vpop.f32.mrb[0].mxu0
    %1705 = vmatprep.mubr.bf16.mxu0 %v1320
    %1706 = vmatmul.mubr.bf16.gmra.mrb[0].mxu0 %v1319
    %v1707 = vpop.f32.mrb[0].mxu0
    %v1708 = vadd.f32 %v1643, %v1707
    %v1709 = vpop.f32.mrb[0].mxu0
    %v1710 = vpop.f32.mrb[0].mxu0
    %v1711 = vadd.f32 %v1646, %v1710
    %v1712 = vpop.f32.mrb[0].mxu0
    %1713 = vdwg.mxu0
    %1714 = vst [vmem:[%s6] sm:$0xff] %v1684
    %1715 = vst [vmem:[%s6 + $0x8] sm:$0xff] %v1687
    %1716 = vst [vmem:[%s6 + $0x10] sm:$0xff] %v1692
    %1717 = vst [vmem:[%s6 + $0x18] sm:$0xff] %v1695
    %1718 = vst [vmem:[%s6 + $0x20] sm:$0xff] %v1700
    %1719 = vst [vmem:[%s6 + $0x28] sm:$0xff] %v1703
    %1720 = vst [vmem:[%s6 + $0x30] sm:$0xff] %v1708
    %1721 = vst [vmem:[%s6 + $0x38] sm:$0xff] %v1711
    // Predicated region
    $region42: #{mlp_classifier_forward.1} parent=1 // pred_check
      _
    $region43: #{mlp_classifier_forward.1} parent=1 // pred_check_branch
      %1723 = sbr.rel (0) target = $region45
    $region44: #{mlp_classifier_forward.1} parent=1 // pred_region
      _
    $region45: #{mlp_classifier_forward.1} parent=1 // pred_fallthru
      _
    // Predicated region
    $region46: #{mlp_classifier_forward.1} parent=1 // pred_check
      _
    $region47: #{mlp_classifier_forward.1} parent=1 // pred_check_branch
      %1725 = sbr.rel (0) target = $region49
    $region48: #{mlp_classifier_forward.1} parent=1 // pred_region
      _
    $region49: #{mlp_classifier_forward.1} parent=1 // pred_fallthru
      _
    %1726 = vsyncpa [#allocation3], 1
    %1727 = vsyncpa [#allocation5], 1
    %1728 = vsyncpa [#allocation8], 1

</llo_original>
